<compile_context>
chip_gen: v5e
topology: v5e:2x2
jax: 0.10.0
libtpu: 0.0.40
codegen_flags: <defaults>
</compile_context>

<pallas_src>
import jax
import jax.numpy as jnp
import numpy as np
from jax import lax
from jax.experimental import pallas as pl
from jax.experimental.pallas import tpu as pltpu

# Small synthetic sizes consistent with DualEncoder.__init__ signature
NODE_DIM, EDGE_DIM = 16, 8          # node_dim, edge_dim
HIDDEN, OUT_DIM = 32, 48            # hidden_dim, output_dim
HEADS = 4                           # num_heads
HEAD_DIM = HIDDEN // HEADS          # GATConv out_channels = hidden_dim // num_heads
TEXT_HIDDEN = 32                    # BERT hidden size stand-in
NEG_SLOPE = 0.2                     # GATConv LeakyReLU default slope
NEG_INF = -1e30
DST_TILE = 8                        # dst rows per grid step
# TODO(synk): at production sizes, pick DST_TILE per generation (v7x ~half of v6e/v5e:
# budget edge tile + ~3 live [H,T,N] f32 intermediates + double buffering < ~24-28 MiB).
F32 = jnp.float32
BF16 = jnp.bfloat16


# ----------------------------------------------------------------------------
# Pure-JAX reference (unfolded, per-head) -- used only for the correctness check
# ----------------------------------------------------------------------------
def _gat_layer_ref(x, edge_raw, adj, W, b, att_src, att_dst, W_edge, att_edge,
                   W_eenc, b_eenc):
    xp = jnp.dot(x, W, preferred_element_type=F32)
    ctr = (((1,), (1,)), ((), ()))
    head_outs = []
    for h in range(HEADS):
        lo, hi = h * HEAD_DIM, (h + 1) * HEAD_DIM
        xp_h = xp[:, lo:hi]
        a_src = lax.dot_general(att_src[h:h + 1, :], xp_h, ctr,
                                preferred_element_type=F32)          # [1, N]
        a_dst = lax.dot_general(xp_h, att_dst[h:h + 1, :], ctr,
                                preferred_element_type=F32)          # [N, 1]
        w2a = lax.dot_general(att_edge[h:h + 1, :], W_edge[:, lo:hi], ctr,
                              preferred_element_type=F32)            # [1, HIDDEN]
        u = lax.dot_general(w2a, W_eenc, ctr, preferred_element_type=F32)  # [1, EDGE_DIM]
        c = jnp.sum(w2a * b_eenc, axis=-1, keepdims=True)
        a_edge = jnp.sum(edge_raw * u[None, :, :], axis=-1) + c
        score = a_dst + a_src + a_edge
        score = jnp.where(score > 0, score, NEG_SLOPE * score)
        score = jnp.where(adj > 0.5, score, NEG_INF)
        score = score - jnp.max(score, axis=-1, keepdims=True)
        p = jnp.where(adj > 0.5, jnp.exp(score), 0.0)
        alpha = p / jnp.sum(p, axis=-1, keepdims=True)
        head_outs.append(jnp.dot(alpha, xp_h, preferred_element_type=F32))
    return jnp.concatenate(head_outs, axis=-1) + b


def _graph_math_ref(node_feat, edge_raw, adj, p):
    x = jnp.dot(node_feat, p["wn"], preferred_element_type=F32) + p["bn"]
    for l in range(2):
        x = _gat_layer_ref(x, edge_raw, adj,
                           p[f"gat{l}_w"], p[f"gat{l}_b"],
                           p[f"gat{l}_asrc"], p[f"gat{l}_adst"],
                           p[f"gat{l}_wedge"], p[f"gat{l}_aedge"],
                           p["we"], p["be"])
        x = jnp.where(x > 0, x, jnp.exp(jnp.minimum(x, 0.0)) - 1.0)     # F.elu
    g = jnp.mean(x, axis=0, keepdims=True)
    h = jnp.dot(g, p["wp1"], preferred_element_type=F32) + p["bp1"]
    h = jnp.maximum(h, 0.0)
    return jnp.dot(h, p["wp2"], preferred_element_type=F32) + p["bp2"]


# ----------------------------------------------------------------------------
# Host-side parameter folding + dense slab packing (off the hot path)
# ----------------------------------------------------------------------------
_SLAB_COLS = 128


def _make_layout():
    """name -> (row0, col0, rows, cols). Small params co-located in the 128 lanes."""
    L = {}
    L["wn"] = (0, 0, NODE_DIM, HIDDEN)                       # rows 0..15
    br = 16                                                  # bias block rows 16..23
    L["bn"] = (br + 0, 0, 1, HIDDEN)
    L["b0"] = (br + 1, 0, 1, HIDDEN)
    L["b1"] = (br + 2, 0, 1, HIDDEN)
    L["bp1"] = (br + 3, 0, 1, HIDDEN)
    L["bp2"] = (br + 4, 0, 1, OUT_DIM)
    L["bpool"] = (br + 5, 0, 1, TEXT_HIDDEN)
    wr = 24                                                  # rows 24..55
    L["w0"] = (wr, 0, HIDDEN, HIDDEN)
    L["w1"] = (wr, 32, HIDDEN, HIDDEN)
    L["wp1"] = (wr, 64, HIDDEN, HIDDEN)
    L["wpool"] = (wr, 96, TEXT_HIDDEN, TEXT_HIDDEN)
    wr2 = 56                                                 # rows 56..87
    L["wp2"] = (wr2, 0, HIDDEN, OUT_DIM)
    L["wsrc0"] = (wr2, 48, HIDDEN, HEADS)
    L["wdst0"] = (wr2, 56, HIDDEN, HEADS)
    L["wsrc1"] = (wr2, 64, HIDDEN, HEADS)
    L["wdst1"] = (wr2, 72, HIDDEN, HEADS)
    cr = 88                                                  # rows 88..95
    L["c0"] = (cr, 0, HEADS, 1)
    L["c1"] = (cr, 8, HEADS, 1)
    return L, 96


_SLAB_LAYOUT, _SLAB_ROWS = _make_layout()


def fold_params(p):
    """Fold all weight-only algebra (exact) so the kernel only does data-dependent math."""
    folded = {"wn": p["wn"], "bn": p["bn"],
              "wp1": p["wp1"], "bp1": p["bp1"],
              "wp2": p["wp2"], "bp2": p["bp2"],
              "wpool": p["w_pool"], "bpool": p["b_pool"]}
    for l in range(2):
        W = p[f"gat{l}_w"]
        Wr = W.reshape(HIDDEN, HEADS, HEAD_DIM)
        folded[f"w{l}"] = W
        folded[f"b{l}"] = p[f"gat{l}_b"]
        # a_src / a_dst for all heads become x @ [HIDDEN, HEADS]
        folded[f"wsrc{l}"] = jnp.einsum("ihd,hd->ih", Wr, p[f"gat{l}_asrc"])
        folded[f"wdst{l}"] = jnp.einsum("ihd,hd->ih", Wr, p[f"gat{l}_adst"])
        # edge path: att_edge_h . lin_edge(edge_encoder(raw)) = raw . U[h] + c[h]
        Wer = p[f"gat{l}_wedge"].reshape(HIDDEN, HEADS, HEAD_DIM)
        w2a = jnp.einsum("hd,jhd->hj", p[f"gat{l}_aedge"], Wer)        # [HEADS, HIDDEN]
        folded[f"u{l}"] = jnp.einsum("ej,hj->he", p["we"], w2a)        # [HEADS, EDGE_DIM]
        folded[f"c{l}"] = jnp.einsum("j,hj->h", p["be"][0], w2a)[:, None]   # [HEADS, 1]
    return folded


def pack_slab(folded):
    slab = np.zeros((_SLAB_ROWS, _SLAB_COLS), np.float32)
    for name, (r0, c0, nr, nc) in _SLAB_LAYOUT.items():
        slab[r0:r0 + nr, c0:c0 + nc] = np.asarray(folded[name], np.float32).reshape(nr, nc)
    return jnp.asarray(slab)


# ----------------------------------------------------------------------------
# Fused Pallas kernel: 2-layer GAT graph encoder + text pooler head
# grid = (layer, dst_tile); x / xp live in VMEM scratch across the whole grid.
# ----------------------------------------------------------------------------
def _fused_kernel(u_ref,                                  # SMEM scalar-prefetch: [2*H*E] f32
                  node_ref, edge_ref, bias_ref, cls_ref, slab_ref,
                  graph_out_ref, text_out_ref,
                  x_ref, xnew_ref, xp_ref, asrc_ref):
    layer = pl.program_id(0)
    t = pl.program_id(1)
    n_tiles = pl.num_programs(1)

    slab = slab_ref[...]                                  # [96,128] f32, tiny & resident

    def P(name):                                          # static slice of the param slab
        r0, c0, nr, nc = _SLAB_LAYOUT[name]
        return slab[r0:r0 + nr, c0:c0 + nc]

    def PL(name):                                         # layer-selected folded param
        return jnp.where(layer == 0, P(name + "0"), P(name + "1"))

    # ---- one-time init: node encoder + BERT pooler head (Linear + tanh) ----
    @pl.when(jnp.logical_and(layer == 0, t == 0))
    def _init():
        x_ref[...] = jnp.dot(node_ref[...], P("wn"),
                             preferred_element_type=F32) + P("bn")
        text_out_ref[...] = jnp.tanh(
            jnp.dot(cls_ref[...], P("wpool"), preferred_element_type=F32) + P("bpool"))

    W = PL("w")
    Bl = PL("b")
    Wsrc = PL("wsrc")
    Wdst = PL("wdst")
    C = PL("c")                                           # [HEADS, 1] edge-path bias

    ct_in = (((0,), (1,)), ((), ()))                      # contract param dim0 with x dim1

    # ---- per-layer precompute (depends only on full x, not on the dst tile) ----
    @pl.when(t == 0)
    def _layer_pre():
        xf = x_ref[...]                                                     # [N, HIDDEN]
        xp_ref[...] = jnp.dot(xf.astype(BF16), W.astype(BF16),
                              preferred_element_type=F32).astype(BF16)      # bf16 MXU operand
        asrc_ref[...] = lax.dot_general(Wsrc, xf, ct_in,
                                        preferred_element_type=F32)         # [HEADS, N]

    # ---- attention scores for this dst tile (heads batched) ----
    row0 = pl.multiple_of(t * DST_TILE, DST_TILE)
    x_tile = x_ref[pl.ds(row0, DST_TILE), :]                                # [T, HIDDEN]

    a_src = asrc_ref[...]                                                   # [HEADS, N]
    a_dst = lax.dot_general(Wdst, x_tile, ct_in,
                            preferred_element_type=F32) + C                 # [HEADS, T]

    # a_edge via EDGE_DIM broadcast-FMAs from SMEM scalars (feature-major edge tile,
    # no lane-splitting reshape).
    # TODO(synk): at production EDGE_DIM, move this contraction onto the MXU.
    edge = edge_ref[...]                                                    # [E, T, N] f32
    head_rows = []
    for h in range(HEADS):
        base = layer * (HEADS * EDGE_DIM) + h * EDGE_DIM
        acc = u_ref[base] * edge[0]
        for e in range(1, EDGE_DIM):
            acc = acc + u_ref[base + e] * edge[e]
        head_rows.append(acc)
    a_edge = jnp.stack(head_rows, axis=0)                                   # [H, T, N]

    score = a_dst[:, :, None] + a_src[:, None, :] + a_edge                  # [H, T, N]
    score = jnp.where(score > 0, score, NEG_SLOPE * score)                  # LeakyReLU(0.2)
    score = score + bias_ref[...][None, :, :]                               # additive 0/-1e30 mask
    score = score - jnp.max(score, axis=-1, keepdims=True)
    p_att = jnp.exp(score)                    # masked entries underflow to exactly 0
    alpha = p_att * pl.reciprocal(jnp.sum(p_att, axis=-1, keepdims=True),
                                  approx=True)                              # softmax over src
    alpha_bf = alpha.astype(BF16)

    # ---- per-head mixing: bf16 MXU dots on static slices of xp (no masked xp copy) ----
    xp_bf = xp_ref[...]                                                     # [N, HIDDEN] bf16
    head_outs = []
    for h in range(HEADS):                                                  # static unroll
        xp_h = xp_bf[:, h * HEAD_DIM:(h + 1) * HEAD_DIM]                    # [N, D]
        head_outs.append(jnp.dot(alpha_bf[h], xp_h,
                                 preferred_element_type=F32))               # [T, D]
    x_new = jnp.concatenate(head_outs, axis=-1) + Bl                        # [T, HIDDEN]
    x_new = jnp.where(x_new > 0, x_new,
                      jnp.exp(jnp.minimum(x_new, 0.0)) - 1.0)               # F.elu (f32)
    xnew_ref[pl.ds(row0, DST_TILE), :] = x_new

    # ---- end of layer: commit x for the next layer ----
    @pl.when(t == n_tiles - 1)
    def _commit():
        x_ref[...] = xnew_ref[...]

    # ---- end of last layer: mean pool + output projection ----
    @pl.when(jnp.logical_and(layer == pl.num_programs(0) - 1, t == n_tiles - 1))
    def _final():
        g = jnp.mean(xnew_ref[...], axis=0, keepdims=True)                  # [1, HIDDEN]
        hproj = jnp.maximum(
            jnp.dot(g, P("wp1"), preferred_element_type=F32) + P("bp1"), 0.0)
        graph_out_ref[...] = (jnp.dot(hproj, P("wp2"),
                                      preferred_element_type=F32) + P("bp2"))


def dual_encoder_pallas(node_feat, edge_fm, adj_bias, cls_hidden, params):
    """Fused forward: (graph_embeddings [1, OUT_DIM], text_embeddings [B, TEXT_HIDDEN]).

    node_feat : [N, NODE_DIM]         adj_bias : [N, N]  additive mask (0 or -1e30)
    edge_fm   : [EDGE_DIM, N, N]      cls_hidden : [B, TEXT_HIDDEN]
    """
    n_nodes = node_feat.shape[0]
    assert n_nodes % DST_TILE == 0, "pad the graph to a multiple of DST_TILE"
    n_tiles = n_nodes // DST_TILE
    n_text = cls_hidden.shape[0]

    folded = fold_params(params)                          # weight-only prep, off the hot path
    slab = pack_slab(folded)
    u_flat = jnp.concatenate([folded["u0"].reshape(-1),
                              folded["u1"].reshape(-1)]).astype(F32)   # [2*H*E] -> SMEM

    grid_spec = pltpu.PrefetchScalarGridSpec(
        num_scalar_prefetch=1,
        grid=(2, n_tiles),                                # (layer, dst_tile); tile axis fastest
        in_specs=[
            pl.BlockSpec((n_nodes, NODE_DIM), lambda l, t, u: (0, 0)),
            pl.BlockSpec((EDGE_DIM, DST_TILE, n_nodes), lambda l, t, u: (0, t, 0)),
            pl.BlockSpec((DST_TILE, n_nodes), lambda l, t, u: (t, 0)),
            pl.BlockSpec((n_text, TEXT_HIDDEN), lambda l, t, u: (0, 0)),
            pl.BlockSpec((_SLAB_ROWS, _SLAB_COLS), lambda l, t, u: (0, 0)),
        ],
        out_specs=(
            pl.BlockSpec((1, OUT_DIM), lambda l, t, u: (0, 0)),
            pl.BlockSpec((n_text, TEXT_HIDDEN), lambda l, t, u: (0, 0)),
        ),
        scratch_shapes=[
            pltpu.VMEM((n_nodes, HIDDEN), F32),           # x   (resident across layers)
            pltpu.VMEM((n_nodes, HIDDEN), F32),           # x_new (written per dst tile)
            pltpu.VMEM((n_nodes, HIDDEN), BF16),          # xp = x @ W (per layer)
            pltpu.VMEM((HEADS, n_nodes), F32),            # a_src (per layer)
        ],
    )
    return pl.pallas_call(
        _fused_kernel,
        out_shape=(jax.ShapeDtypeStruct((1, OUT_DIM), F32),
                   jax.ShapeDtypeStruct((n_text, TEXT_HIDDEN), F32)),
        grid_spec=grid_spec,
        compiler_params=pltpu.CompilerParams(
            # dst axis carries x in scratch -> must be "arbitrary"; see header TODO re: v7x.
            dimension_semantics=("arbitrary", "arbitrary"),
            vmem_limit_bytes=32 * 1024 * 1024,
        ),
    )(u_flat, node_feat, edge_fm, adj_bias, cls_hidden, slab)


# ----------------------------------------------------------------------------
# Glue: sparse edge_index/edge_features -> dense feature-major tensors (not hot path)
# ----------------------------------------------------------------------------
def densify_edges(edge_index, edge_features, num_nodes):
    # TODO(synk): assumes a simple graph (no duplicate / pre-existing self edges) and >=1
    # incoming edge per node, matching PyG add_self_loops(fill_value='mean') semantics.
    src, dst = edge_index[0], edge_index[1]
    e_fm = jnp.zeros((EDGE_DIM, num_nodes, num_nodes), F32).at[:, dst, src].set(edge_features.T)
    adj_bias = jnp.full((num_nodes, num_nodes), NEG_INF, F32).at[dst, src].set(0.0)
    deg = jnp.zeros((num_nodes,), F32).at[dst].add(1.0)
    mean_in = (jnp.zeros((num_nodes, EDGE_DIM), F32).at[dst].add(edge_features)
               / jnp.maximum(deg, 1.0)[:, None])
    idx = jnp.arange(num_nodes)
    e_fm = e_fm.at[:, idx, idx].set(mean_in.T)            # self-loop attr = mean of in-edges
    adj_bias = adj_bias.at[idx, idx].set(0.0)
    return e_fm, adj_bias


# ----------------------------------------------------------------------------
# Deterministic parameter init (shapes implied by DualEncoder.__init__)
# ----------------------------------------------------------------------------
def init_params(key):
    ks = iter(jax.random.split(key, 32))

    def w(shape, scale):
        return jax.random.normal(next(ks), shape, F32) * scale

    p = {
        "wn": w((NODE_DIM, HIDDEN), 1.0 / np.sqrt(NODE_DIM)),   # node_encoder
        "bn": w((1, HIDDEN), 0.02),
        "we": w((EDGE_DIM, HIDDEN), 1.0 / np.sqrt(EDGE_DIM)),   # edge_encoder
        "be": w((1, HIDDEN), 0.02),
        "wp1": w((HIDDEN, HIDDEN), 1.0 / np.sqrt(HIDDEN)),      # output_proj[0]
        "bp1": w((1, HIDDEN), 0.02),
        "wp2": w((HIDDEN, OUT_DIM), 1.0 / np.sqrt(HIDDEN)),     # output_proj[3]
        "bp2": w((1, OUT_DIM), 0.02),
    }
    for l in range(2):  # two GATConv layers
        p[f"gat{l}_w"] = w((HIDDEN, HIDDEN), 1.0 / np.sqrt(HIDDEN))       # lin
        p[f"gat{l}_b"] = w((1, HIDDEN), 0.02)
        p[f"gat{l}_asrc"] = w((HEADS, HEAD_DIM), 0.3)
        p[f"gat{l}_adst"] = w((HEADS, HEAD_DIM), 0.3)
        p[f"gat{l}_wedge"] = w((HIDDEN, HIDDEN), 1.0 / np.sqrt(HIDDEN))   # lin_edge (no bias)
        p[f"gat{l}_aedge"] = w((HEADS, HEAD_DIM), 0.3)
    p["w_pool"] = w((TEXT_HIDDEN, TEXT_HIDDEN), 1.0 / np.sqrt(TEXT_HIDDEN))  # BERT pooler
    p["b_pool"] = w((1, TEXT_HIDDEN), 0.02)
    return p


if __name__ == "__main__":
    key = jax.random.PRNGKey(0)
    k_param, k_node, k_edge, k_text = jax.random.split(key, 4)
    params = init_params(k_param)

    # --- graph inputs: N=16 -> 2 dst tiles, exercises the cross-tile/layer carry ---
    N = 16
    node_features = jax.random.normal(k_node, (N, NODE_DIM), F32)
    ring_src = jnp.arange(N, dtype=jnp.int32)
    ring_dst = (ring_src + 1) % N                         # every node gets >=1 in-edge
    extra_src = jnp.array([0, 2, 5, 7, 9, 12, 14, 3], jnp.int32)
    extra_dst = jnp.array([4, 6, 3, 1, 13, 2, 8, 11], jnp.int32)
    src = jnp.concatenate([ring_src, extra_src])
    dst = jnp.concatenate([ring_dst, extra_dst])
    edge_index = jnp.stack([src, dst])                    # [2, E]
    edge_features = jax.random.normal(k_edge, (src.shape[0], EDGE_DIM), F32)
    edge_fm, adj_bias = densify_edges(edge_index, edge_features, N)

    # --- text inputs ---
    # TODO(synk): the pretrained BERT encoder + tokenizer have no Pallas equivalent; we use
    # synthetic CLS hidden states and implement only the pooler head (Linear + tanh).
    cls_hidden = jax.random.normal(k_text, (2, TEXT_HIDDEN), F32)

    # --- forward (single fused Pallas call) ---
    graph_emb, text_emb = dual_encoder_pallas(node_features, edge_fm, adj_bias,
                                              cls_hidden, params)
    jax.block_until_ready(graph_emb)
    jax.block_until_ready(text_emb)

    # --- pure-JAX reference check (tolerance absorbs bf16 MXU operands + approx recip) ---
    adj01 = (adj_bias == 0.0).astype(F32)
    edge_raw = jnp.transpose(edge_fm, (1, 2, 0))          # [N_dst, N_src, E] for the ref
    ref_graph = _graph_math_ref(node_features, edge_raw, adj01, params)
    ref_text = jnp.tanh(cls_hidden @ params["w_pool"] + params["b_pool"])
    np.testing.assert_allclose(np.asarray(graph_emb), np.asarray(ref_graph),
                               rtol=3e-2, atol=3e-2)
    np.testing.assert_allclose(np.asarray(text_emb), np.asarray(ref_text),
                               rtol=2e-3, atol=2e-3)
    assert graph_emb.shape == (1, OUT_DIM) and text_emb.shape == (2, TEXT_HIDDEN)

    print("KERNEL_OK")
</pallas_src>

<mosaic_0001>
module attributes {stable_mosaic.version = 11 : i64} {
  func.func @_fused_kernel(%arg0: i32, %arg1: i32, %arg2: memref<64xf32, #tpu.memory_space<smem>>, %arg3: memref<16x16xf32, #tpu.memory_space<vmem>>, %arg4: memref<8x8x16xf32, #tpu.memory_space<vmem>>, %arg5: memref<8x16xf32, #tpu.memory_space<vmem>>, %arg6: memref<2x32xf32, #tpu.memory_space<vmem>>, %arg7: memref<96x128xf32, #tpu.memory_space<vmem>>, %arg8: memref<1x48xf32, #tpu.memory_space<vmem>>, %arg9: memref<2x32xf32, #tpu.memory_space<vmem>>, %arg10: memref<16x32xf32, #tpu.memory_space<vmem>>, %arg11: memref<16x32xf32, #tpu.memory_space<vmem>>, %arg12: memref<16x32xbf16, #tpu.memory_space<vmem>>, %arg13: memref<4x16xf32, #tpu.memory_space<vmem>>) attributes {dimension_semantics = [#tpu.dimension_semantics<arbitrary>, #tpu.dimension_semantics<arbitrary>], iteration_bounds = array<i64: 2, 2>, scalar_prefetch = 1 : i64, scratch_operands = 4 : i64, tpu.core_type = #tpu.core_type<tc>, window_params = [{pipeline_mode = #tpu.pipeline_mode<synchronous>, transform_indices = @transform_0, window_bounds = array<i64: 16, 16>}, {transform_indices = @transform_1, window_bounds = array<i64: 8, 8, 16>}, {transform_indices = @transform_2, window_bounds = array<i64: 8, 16>}, {pipeline_mode = #tpu.pipeline_mode<synchronous>, transform_indices = @transform_3, window_bounds = array<i64: 2, 32>}, {pipeline_mode = #tpu.pipeline_mode<synchronous>, transform_indices = @transform_4, window_bounds = array<i64: 96, 128>}, {pipeline_mode = #tpu.pipeline_mode<synchronous>, transform_indices = @transform_5, window_bounds = array<i64: 1, 48>}, {pipeline_mode = #tpu.pipeline_mode<synchronous>, transform_indices = @transform_6, window_bounds = array<i64: 2, 32>}]} {
    %c0 = arith.constant 0 : index
    %c0_0 = arith.constant 0 : index
    %0 = vector.load %arg7[%c0, %c0_0] : memref<96x128xf32, #tpu.memory_space<vmem>>, vector<96x128xf32>
    %c0_i32 = arith.constant 0 : i32
    %1 = arith.cmpi eq, %arg0, %c0_i32 : i32
    %c0_i32_1 = arith.constant 0 : i32
    %2 = arith.cmpi eq, %arg1, %c0_i32_1 : i32
    %3 = arith.andi %1, %2 : i1
    %4 = arith.extui %3 : i1 to i32
    %c0_i32_2 = arith.constant 0 : i32
    %5 = arith.cmpi ne, %4, %c0_i32_2 : i32
    scf.if %5 {
      %c0_63 = arith.constant 0 : index
      %c0_64 = arith.constant 0 : index
      %363 = vector.load %arg3[%c0_63, %c0_64] : memref<16x16xf32, #tpu.memory_space<vmem>>, vector<16x16xf32>
      %364 = vector.extract_strided_slice %0 {offsets = [0, 0], sizes = [16, 32], strides = [1, 1]} : vector<96x128xf32> to vector<16x32xf32>
      %cst_65 = arith.constant dense<0.000000e+00> : vector<16x32xf32>
      %365 = tpu.matmul %363, %364, %cst_65 {dimension_numbers = #tpu.dot_dimension_numbers<[1], [0], [0], [1], [0, 0, 1, 1], [], []>} : vector<16x16xf32>, vector<16x32xf32>, vector<16x32xf32> -> vector<16x32xf32>
      %366 = vector.extract_strided_slice %0 {offsets = [16, 0], sizes = [1, 32], strides = [1, 1]} : vector<96x128xf32> to vector<1x32xf32>
      %367 = vector.broadcast %366 : vector<1x32xf32> to vector<16x32xf32>
      %368 = arith.addf %365, %367 : vector<16x32xf32>
      %c0_66 = arith.constant 0 : index
      %c0_67 = arith.constant 0 : index
      %369 = vector.load %arg10[%c0_66, %c0_67] : memref<16x32xf32, #tpu.memory_space<vmem>>, vector<16x32xf32>
      tpu.vector_store %arg10[%c0_66, %c0_67], %368 {strides = array<i32>} : memref<16x32xf32, #tpu.memory_space<vmem>>, vector<16x32xf32>,
      %c0_68 = arith.constant 0 : index
      %c0_69 = arith.constant 0 : index
      %370 = vector.load %arg6[%c0_68, %c0_69] : memref<2x32xf32, #tpu.memory_space<vmem>>, vector<2x32xf32>
      %371 = vector.extract_strided_slice %0 {offsets = [24, 96], sizes = [32, 32], strides = [1, 1]} : vector<96x128xf32> to vector<32x32xf32>
      %cst_70 = arith.constant dense<0.000000e+00> : vector<2x32xf32>
      %372 = tpu.matmul %370, %371, %cst_70 {dimension_numbers = #tpu.dot_dimension_numbers<[1], [0], [0], [1], [0, 0, 1, 1], [], []>} : vector<2x32xf32>, vector<32x32xf32>, vector<2x32xf32> -> vector<2x32xf32>
      %373 = vector.extract_strided_slice %0 {offsets = [21, 0], sizes = [1, 32], strides = [1, 1]} : vector<96x128xf32> to vector<1x32xf32>
      %374 = vector.broadcast %373 : vector<1x32xf32> to vector<2x32xf32>
      %375 = arith.addf %372, %374 : vector<2x32xf32>
      %376 = math.tanh %375 : vector<2x32xf32>
      %c0_71 = arith.constant 0 : index
      %c0_72 = arith.constant 0 : index
      %377 = vector.load %arg9[%c0_71, %c0_72] : memref<2x32xf32, #tpu.memory_space<vmem>>, vector<2x32xf32>
      tpu.vector_store %arg9[%c0_71, %c0_72], %376 {strides = array<i32>} : memref<2x32xf32, #tpu.memory_space<vmem>>, vector<2x32xf32>,
    } else {
    }
    %c0_i32_3 = arith.constant 0 : i32
    %6 = arith.cmpi eq, %arg0, %c0_i32_3 : i32
    %7 = vector.extract_strided_slice %0 {offsets = [24, 0], sizes = [32, 32], strides = [1, 1]} : vector<96x128xf32> to vector<32x32xf32>
    %8 = vector.extract_strided_slice %0 {offsets = [24, 32], sizes = [32, 32], strides = [1, 1]} : vector<96x128xf32> to vector<32x32xf32>
    %9 = arith.select %6, %7, %8 : vector<32x32xf32>
    %c0_i32_4 = arith.constant 0 : i32
    %10 = arith.cmpi eq, %arg0, %c0_i32_4 : i32
    %11 = vector.extract_strided_slice %0 {offsets = [17, 0], sizes = [1, 32], strides = [1, 1]} : vector<96x128xf32> to vector<1x32xf32>
    %12 = vector.extract_strided_slice %0 {offsets = [18, 0], sizes = [1, 32], strides = [1, 1]} : vector<96x128xf32> to vector<1x32xf32>
    %13 = arith.select %10, %11, %12 : vector<1x32xf32>
    %c0_i32_5 = arith.constant 0 : i32
    %14 = arith.cmpi eq, %arg0, %c0_i32_5 : i32
    %15 = vector.extract_strided_slice %0 {offsets = [56, 48], sizes = [32, 4], strides = [1, 1]} : vector<96x128xf32> to vector<32x4xf32>
    %16 = vector.extract_strided_slice %0 {offsets = [56, 64], sizes = [32, 4], strides = [1, 1]} : vector<96x128xf32> to vector<32x4xf32>
    %17 = arith.select %14, %15, %16 : vector<32x4xf32>
    %c0_i32_6 = arith.constant 0 : i32
    %18 = arith.cmpi eq, %arg0, %c0_i32_6 : i32
    %19 = vector.extract_strided_slice %0 {offsets = [56, 56], sizes = [32, 4], strides = [1, 1]} : vector<96x128xf32> to vector<32x4xf32>
    %20 = vector.extract_strided_slice %0 {offsets = [56, 72], sizes = [32, 4], strides = [1, 1]} : vector<96x128xf32> to vector<32x4xf32>
    %21 = arith.select %18, %19, %20 : vector<32x4xf32>
    %c0_i32_7 = arith.constant 0 : i32
    %22 = arith.cmpi eq, %arg0, %c0_i32_7 : i32
    %23 = vector.extract_strided_slice %0 {offsets = [88, 0], sizes = [4, 1], strides = [1, 1]} : vector<96x128xf32> to vector<4x1xf32>
    %24 = vector.extract_strided_slice %0 {offsets = [88, 8], sizes = [4, 1], strides = [1, 1]} : vector<96x128xf32> to vector<4x1xf32>
    %25 = arith.select %22, %23, %24 : vector<4x1xf32>
    %c0_i32_8 = arith.constant 0 : i32
    %26 = arith.cmpi eq, %arg1, %c0_i32_8 : i32
    %27 = arith.extui %26 : i1 to i32
    %c0_i32_9 = arith.constant 0 : i32
    %28 = arith.cmpi ne, %27, %c0_i32_9 : i32
    scf.if %28 {
      %c0_63 = arith.constant 0 : index
      %c0_64 = arith.constant 0 : index
      %363 = vector.load %arg10[%c0_63, %c0_64] : memref<16x32xf32, #tpu.memory_space<vmem>>, vector<16x32xf32>
      %364 = arith.truncf %363 : vector<16x32xf32> to vector<16x32xbf16>
      %365 = arith.truncf %9 : vector<32x32xf32> to vector<32x32xbf16>
      %cst_65 = arith.constant dense<0.000000e+00> : vector<16x32xf32>
      %366 = tpu.matmul %364, %365, %cst_65 {dimension_numbers = #tpu.dot_dimension_numbers<[1], [0], [0], [1], [0, 0, 1, 1], [], []>} : vector<16x32xbf16>, vector<32x32xbf16>, vector<16x32xf32> -> vector<16x32xf32>
      %367 = arith.truncf %366 : vector<16x32xf32> to vector<16x32xbf16>
      %c0_66 = arith.constant 0 : index
      %c0_67 = arith.constant 0 : index
      %368 = vector.load %arg12[%c0_66, %c0_67] : memref<16x32xbf16, #tpu.memory_space<vmem>>, vector<16x32xbf16>
      tpu.vector_store %arg12[%c0_66, %c0_67], %367 {strides = array<i32>} : memref<16x32xbf16, #tpu.memory_space<vmem>>, vector<16x32xbf16>,
      %cst_68 = arith.constant dense<0.000000e+00> : vector<4x16xf32>
      %369 = tpu.matmul %17, %363, %cst_68 {dimension_numbers = #tpu.dot_dimension_numbers<[0], [1], [1], [0], [0, 1, 1, 0], [], []>} : vector<32x4xf32>, vector<16x32xf32>, vector<4x16xf32> -> vector<4x16xf32>
      %c0_69 = arith.constant 0 : index
      %c0_70 = arith.constant 0 : index
      %370 = vector.load %arg13[%c0_69, %c0_70] : memref<4x16xf32, #tpu.memory_space<vmem>>, vector<4x16xf32>
      tpu.vector_store %arg13[%c0_69, %c0_70], %369 {strides = array<i32>} : memref<4x16xf32, #tpu.memory_space<vmem>>, vector<4x16xf32>,
    } else {
    }
    %c8_i32 = arith.constant 8 : i32
    %29 = arith.muli %arg1, %c8_i32 : i32
    %30 = tpu.assume_multiple %29, 8 : i32
    %31 = arith.index_cast %30 : i32 to index
    %c0_10 = arith.constant 0 : index
    %32 = vector.load %arg10[%31, %c0_10] : memref<16x32xf32, #tpu.memory_space<vmem>>, vector<8x32xf32>
    %c0_11 = arith.constant 0 : index
    %c0_12 = arith.constant 0 : index
    %33 = vector.load %arg13[%c0_11, %c0_12] : memref<4x16xf32, #tpu.memory_space<vmem>>, vector<4x16xf32>
    %cst = arith.constant dense<0.000000e+00> : vector<4x8xf32>
    %34 = tpu.matmul %21, %32, %cst {dimension_numbers = #tpu.dot_dimension_numbers<[0], [1], [1], [0], [0, 1, 1, 0], [], []>} : vector<32x4xf32>, vector<8x32xf32>, vector<4x8xf32> -> vector<4x8xf32>
    %35 = vector.broadcast %25 : vector<4x1xf32> to vector<4x8xf32>
    %36 = arith.addf %34, %35 : vector<4x8xf32>
    %c0_13 = arith.constant 0 : index
    %c0_14 = arith.constant 0 : index
    %c0_15 = arith.constant 0 : index
    %37 = vector.load %arg4[%c0_13, %c0_14, %c0_15] : memref<8x8x16xf32, #tpu.memory_space<vmem>>, vector<8x8x16xf32>
    %c32_i32 = arith.constant 32 : i32
    %38 = arith.muli %arg0, %c32_i32 : i32
    %c0_i32_16 = arith.constant 0 : i32
    %39 = arith.addi %38, %c0_i32_16 : i32
    %40 = arith.index_cast %39 : i32 to index
    %41 = memref.load %arg2[%40] : memref<64xf32, #tpu.memory_space<smem>>
    %42 = vector.extract_strided_slice %37 {offsets = [0, 0, 0], sizes = [1, 8, 16], strides = [1, 1, 1]} : vector<8x8x16xf32> to vector<1x8x16xf32>
    %43 = vector.shape_cast %42 : vector<1x8x16xf32> to vector<8x16xf32>
    %44 = vector.broadcast %41 : f32 to vector<8x16xf32>
    %45 = arith.mulf %44, %43 : vector<8x16xf32>
    %c1_i32 = arith.constant 1 : i32
    %46 = arith.addi %39, %c1_i32 : i32
    %47 = arith.index_cast %46 : i32 to index
    %48 = memref.load %arg2[%47] : memref<64xf32, #tpu.memory_space<smem>>
    %49 = vector.extract_strided_slice %37 {offsets = [1, 0, 0], sizes = [1, 8, 16], strides = [1, 1, 1]} : vector<8x8x16xf32> to vector<1x8x16xf32>
    %50 = vector.shape_cast %49 : vector<1x8x16xf32> to vector<8x16xf32>
    %51 = vector.broadcast %48 : f32 to vector<8x16xf32>
    %52 = arith.mulf %51, %50 : vector<8x16xf32>
    %53 = arith.addf %45, %52 : vector<8x16xf32>
    %c2_i32 = arith.constant 2 : i32
    %54 = arith.addi %39, %c2_i32 : i32
    %55 = arith.index_cast %54 : i32 to index
    %56 = memref.load %arg2[%55] : memref<64xf32, #tpu.memory_space<smem>>
    %57 = vector.extract_strided_slice %37 {offsets = [2, 0, 0], sizes = [1, 8, 16], strides = [1, 1, 1]} : vector<8x8x16xf32> to vector<1x8x16xf32>
    %58 = vector.shape_cast %57 : vector<1x8x16xf32> to vector<8x16xf32>
    %59 = vector.broadcast %56 : f32 to vector<8x16xf32>
    %60 = arith.mulf %59, %58 : vector<8x16xf32>
    %61 = arith.addf %53, %60 : vector<8x16xf32>
    %c3_i32 = arith.constant 3 : i32
    %62 = arith.addi %39, %c3_i32 : i32
    %63 = arith.index_cast %62 : i32 to index
    %64 = memref.load %arg2[%63] : memref<64xf32, #tpu.memory_space<smem>>
    %65 = vector.extract_strided_slice %37 {offsets = [3, 0, 0], sizes = [1, 8, 16], strides = [1, 1, 1]} : vector<8x8x16xf32> to vector<1x8x16xf32>
    %66 = vector.shape_cast %65 : vector<1x8x16xf32> to vector<8x16xf32>
    %67 = vector.broadcast %64 : f32 to vector<8x16xf32>
    %68 = arith.mulf %67, %66 : vector<8x16xf32>
    %69 = arith.addf %61, %68 : vector<8x16xf32>
    %c4_i32 = arith.constant 4 : i32
    %70 = arith.addi %39, %c4_i32 : i32
    %71 = arith.index_cast %70 : i32 to index
    %72 = memref.load %arg2[%71] : memref<64xf32, #tpu.memory_space<smem>>
    %73 = vector.extract_strided_slice %37 {offsets = [4, 0, 0], sizes = [1, 8, 16], strides = [1, 1, 1]} : vector<8x8x16xf32> to vector<1x8x16xf32>
    %74 = vector.shape_cast %73 : vector<1x8x16xf32> to vector<8x16xf32>
    %75 = vector.broadcast %72 : f32 to vector<8x16xf32>
    %76 = arith.mulf %75, %74 : vector<8x16xf32>
    %77 = arith.addf %69, %76 : vector<8x16xf32>
    %c5_i32 = arith.constant 5 : i32
    %78 = arith.addi %39, %c5_i32 : i32
    %79 = arith.index_cast %78 : i32 to index
    %80 = memref.load %arg2[%79] : memref<64xf32, #tpu.memory_space<smem>>
    %81 = vector.extract_strided_slice %37 {offsets = [5, 0, 0], sizes = [1, 8, 16], strides = [1, 1, 1]} : vector<8x8x16xf32> to vector<1x8x16xf32>
    %82 = vector.shape_cast %81 : vector<1x8x16xf32> to vector<8x16xf32>
    %83 = vector.broadcast %80 : f32 to vector<8x16xf32>
    %84 = arith.mulf %83, %82 : vector<8x16xf32>
    %85 = arith.addf %77, %84 : vector<8x16xf32>
    %c6_i32 = arith.constant 6 : i32
    %86 = arith.addi %39, %c6_i32 : i32
    %87 = arith.index_cast %86 : i32 to index
    %88 = memref.load %arg2[%87] : memref<64xf32, #tpu.memory_space<smem>>
    %89 = vector.extract_strided_slice %37 {offsets = [6, 0, 0], sizes = [1, 8, 16], strides = [1, 1, 1]} : vector<8x8x16xf32> to vector<1x8x16xf32>
    %90 = vector.shape_cast %89 : vector<1x8x16xf32> to vector<8x16xf32>
    %91 = vector.broadcast %88 : f32 to vector<8x16xf32>
    %92 = arith.mulf %91, %90 : vector<8x16xf32>
    %93 = arith.addf %85, %92 : vector<8x16xf32>
    %c7_i32 = arith.constant 7 : i32
    %94 = arith.addi %39, %c7_i32 : i32
    %95 = arith.index_cast %94 : i32 to index
    %96 = memref.load %arg2[%95] : memref<64xf32, #tpu.memory_space<smem>>
    %97 = vector.extract_strided_slice %37 {offsets = [7, 0, 0], sizes = [1, 8, 16], strides = [1, 1, 1]} : vector<8x8x16xf32> to vector<1x8x16xf32>
    %98 = vector.shape_cast %97 : vector<1x8x16xf32> to vector<8x16xf32>
    %99 = vector.broadcast %96 : f32 to vector<8x16xf32>
    %100 = arith.mulf %99, %98 : vector<8x16xf32>
    %101 = arith.addf %93, %100 : vector<8x16xf32>
    %c32_i32_17 = arith.constant 32 : i32
    %102 = arith.muli %arg0, %c32_i32_17 : i32
    %c8_i32_18 = arith.constant 8 : i32
    %103 = arith.addi %102, %c8_i32_18 : i32
    %104 = arith.index_cast %103 : i32 to index
    %105 = memref.load %arg2[%104] : memref<64xf32, #tpu.memory_space<smem>>
    %106 = vector.extract_strided_slice %37 {offsets = [0, 0, 0], sizes = [1, 8, 16], strides = [1, 1, 1]} : vector<8x8x16xf32> to vector<1x8x16xf32>
    %107 = vector.shape_cast %106 : vector<1x8x16xf32> to vector<8x16xf32>
    %108 = vector.broadcast %105 : f32 to vector<8x16xf32>
    %109 = arith.mulf %108, %107 : vector<8x16xf32>
    %c1_i32_19 = arith.constant 1 : i32
    %110 = arith.addi %103, %c1_i32_19 : i32
    %111 = arith.index_cast %110 : i32 to index
    %112 = memref.load %arg2[%111] : memref<64xf32, #tpu.memory_space<smem>>
    %113 = vector.extract_strided_slice %37 {offsets = [1, 0, 0], sizes = [1, 8, 16], strides = [1, 1, 1]} : vector<8x8x16xf32> to vector<1x8x16xf32>
    %114 = vector.shape_cast %113 : vector<1x8x16xf32> to vector<8x16xf32>
    %115 = vector.broadcast %112 : f32 to vector<8x16xf32>
    %116 = arith.mulf %115, %114 : vector<8x16xf32>
    %117 = arith.addf %109, %116 : vector<8x16xf32>
    %c2_i32_20 = arith.constant 2 : i32
    %118 = arith.addi %103, %c2_i32_20 : i32
    %119 = arith.index_cast %118 : i32 to index
    %120 = memref.load %arg2[%119] : memref<64xf32, #tpu.memory_space<smem>>
    %121 = vector.extract_strided_slice %37 {offsets = [2, 0, 0], sizes = [1, 8, 16], strides = [1, 1, 1]} : vector<8x8x16xf32> to vector<1x8x16xf32>
    %122 = vector.shape_cast %121 : vector<1x8x16xf32> to vector<8x16xf32>
    %123 = vector.broadcast %120 : f32 to vector<8x16xf32>
    %124 = arith.mulf %123, %122 : vector<8x16xf32>
    %125 = arith.addf %117, %124 : vector<8x16xf32>
    %c3_i32_21 = arith.constant 3 : i32
    %126 = arith.addi %103, %c3_i32_21 : i32
    %127 = arith.index_cast %126 : i32 to index
    %128 = memref.load %arg2[%127] : memref<64xf32, #tpu.memory_space<smem>>
    %129 = vector.extract_strided_slice %37 {offsets = [3, 0, 0], sizes = [1, 8, 16], strides = [1, 1, 1]} : vector<8x8x16xf32> to vector<1x8x16xf32>
    %130 = vector.shape_cast %129 : vector<1x8x16xf32> to vector<8x16xf32>
    %131 = vector.broadcast %128 : f32 to vector<8x16xf32>
    %132 = arith.mulf %131, %130 : vector<8x16xf32>
    %133 = arith.addf %125, %132 : vector<8x16xf32>
    %c4_i32_22 = arith.constant 4 : i32
    %134 = arith.addi %103, %c4_i32_22 : i32
    %135 = arith.index_cast %134 : i32 to index
    %136 = memref.load %arg2[%135] : memref<64xf32, #tpu.memory_space<smem>>
    %137 = vector.extract_strided_slice %37 {offsets = [4, 0, 0], sizes = [1, 8, 16], strides = [1, 1, 1]} : vector<8x8x16xf32> to vector<1x8x16xf32>
    %138 = vector.shape_cast %137 : vector<1x8x16xf32> to vector<8x16xf32>
    %139 = vector.broadcast %136 : f32 to vector<8x16xf32>
    %140 = arith.mulf %139, %138 : vector<8x16xf32>
    %141 = arith.addf %133, %140 : vector<8x16xf32>
    %c5_i32_23 = arith.constant 5 : i32
    %142 = arith.addi %103, %c5_i32_23 : i32
    %143 = arith.index_cast %142 : i32 to index
    %144 = memref.load %arg2[%143] : memref<64xf32, #tpu.memory_space<smem>>
    %145 = vector.extract_strided_slice %37 {offsets = [5, 0, 0], sizes = [1, 8, 16], strides = [1, 1, 1]} : vector<8x8x16xf32> to vector<1x8x16xf32>
    %146 = vector.shape_cast %145 : vector<1x8x16xf32> to vector<8x16xf32>
    %147 = vector.broadcast %144 : f32 to vector<8x16xf32>
    %148 = arith.mulf %147, %146 : vector<8x16xf32>
    %149 = arith.addf %141, %148 : vector<8x16xf32>
    %c6_i32_24 = arith.constant 6 : i32
    %150 = arith.addi %103, %c6_i32_24 : i32
    %151 = arith.index_cast %150 : i32 to index
    %152 = memref.load %arg2[%151] : memref<64xf32, #tpu.memory_space<smem>>
    %153 = vector.extract_strided_slice %37 {offsets = [6, 0, 0], sizes = [1, 8, 16], strides = [1, 1, 1]} : vector<8x8x16xf32> to vector<1x8x16xf32>
    %154 = vector.shape_cast %153 : vector<1x8x16xf32> to vector<8x16xf32>
    %155 = vector.broadcast %152 : f32 to vector<8x16xf32>
    %156 = arith.mulf %155, %154 : vector<8x16xf32>
    %157 = arith.addf %149, %156 : vector<8x16xf32>
    %c7_i32_25 = arith.constant 7 : i32
    %158 = arith.addi %103, %c7_i32_25 : i32
    %159 = arith.index_cast %158 : i32 to index
    %160 = memref.load %arg2[%159] : memref<64xf32, #tpu.memory_space<smem>>
    %161 = vector.extract_strided_slice %37 {offsets = [7, 0, 0], sizes = [1, 8, 16], strides = [1, 1, 1]} : vector<8x8x16xf32> to vector<1x8x16xf32>
    %162 = vector.shape_cast %161 : vector<1x8x16xf32> to vector<8x16xf32>
    %163 = vector.broadcast %160 : f32 to vector<8x16xf32>
    %164 = arith.mulf %163, %162 : vector<8x16xf32>
    %165 = arith.addf %157, %164 : vector<8x16xf32>
    %c32_i32_26 = arith.constant 32 : i32
    %166 = arith.muli %arg0, %c32_i32_26 : i32
    %c16_i32 = arith.constant 16 : i32
    %167 = arith.addi %166, %c16_i32 : i32
    %168 = arith.index_cast %167 : i32 to index
    %169 = memref.load %arg2[%168] : memref<64xf32, #tpu.memory_space<smem>>
    %170 = vector.extract_strided_slice %37 {offsets = [0, 0, 0], sizes = [1, 8, 16], strides = [1, 1, 1]} : vector<8x8x16xf32> to vector<1x8x16xf32>
    %171 = vector.shape_cast %170 : vector<1x8x16xf32> to vector<8x16xf32>
    %172 = vector.broadcast %169 : f32 to vector<8x16xf32>
    %173 = arith.mulf %172, %171 : vector<8x16xf32>
    %c1_i32_27 = arith.constant 1 : i32
    %174 = arith.addi %167, %c1_i32_27 : i32
    %175 = arith.index_cast %174 : i32 to index
    %176 = memref.load %arg2[%175] : memref<64xf32, #tpu.memory_space<smem>>
    %177 = vector.extract_strided_slice %37 {offsets = [1, 0, 0], sizes = [1, 8, 16], strides = [1, 1, 1]} : vector<8x8x16xf32> to vector<1x8x16xf32>
    %178 = vector.shape_cast %177 : vector<1x8x16xf32> to vector<8x16xf32>
    %179 = vector.broadcast %176 : f32 to vector<8x16xf32>
    %180 = arith.mulf %179, %178 : vector<8x16xf32>
    %181 = arith.addf %173, %180 : vector<8x16xf32>
    %c2_i32_28 = arith.constant 2 : i32
    %182 = arith.addi %167, %c2_i32_28 : i32
    %183 = arith.index_cast %182 : i32 to index
    %184 = memref.load %arg2[%183] : memref<64xf32, #tpu.memory_space<smem>>
    %185 = vector.extract_strided_slice %37 {offsets = [2, 0, 0], sizes = [1, 8, 16], strides = [1, 1, 1]} : vector<8x8x16xf32> to vector<1x8x16xf32>
    %186 = vector.shape_cast %185 : vector<1x8x16xf32> to vector<8x16xf32>
    %187 = vector.broadcast %184 : f32 to vector<8x16xf32>
    %188 = arith.mulf %187, %186 : vector<8x16xf32>
    %189 = arith.addf %181, %188 : vector<8x16xf32>
    %c3_i32_29 = arith.constant 3 : i32
    %190 = arith.addi %167, %c3_i32_29 : i32
    %191 = arith.index_cast %190 : i32 to index
    %192 = memref.load %arg2[%191] : memref<64xf32, #tpu.memory_space<smem>>
    %193 = vector.extract_strided_slice %37 {offsets = [3, 0, 0], sizes = [1, 8, 16], strides = [1, 1, 1]} : vector<8x8x16xf32> to vector<1x8x16xf32>
    %194 = vector.shape_cast %193 : vector<1x8x16xf32> to vector<8x16xf32>
    %195 = vector.broadcast %192 : f32 to vector<8x16xf32>
    %196 = arith.mulf %195, %194 : vector<8x16xf32>
    %197 = arith.addf %189, %196 : vector<8x16xf32>
    %c4_i32_30 = arith.constant 4 : i32
    %198 = arith.addi %167, %c4_i32_30 : i32
    %199 = arith.index_cast %198 : i32 to index
    %200 = memref.load %arg2[%199] : memref<64xf32, #tpu.memory_space<smem>>
    %201 = vector.extract_strided_slice %37 {offsets = [4, 0, 0], sizes = [1, 8, 16], strides = [1, 1, 1]} : vector<8x8x16xf32> to vector<1x8x16xf32>
    %202 = vector.shape_cast %201 : vector<1x8x16xf32> to vector<8x16xf32>
    %203 = vector.broadcast %200 : f32 to vector<8x16xf32>
    %204 = arith.mulf %203, %202 : vector<8x16xf32>
    %205 = arith.addf %197, %204 : vector<8x16xf32>
    %c5_i32_31 = arith.constant 5 : i32
    %206 = arith.addi %167, %c5_i32_31 : i32
    %207 = arith.index_cast %206 : i32 to index
    %208 = memref.load %arg2[%207] : memref<64xf32, #tpu.memory_space<smem>>
    %209 = vector.extract_strided_slice %37 {offsets = [5, 0, 0], sizes = [1, 8, 16], strides = [1, 1, 1]} : vector<8x8x16xf32> to vector<1x8x16xf32>
    %210 = vector.shape_cast %209 : vector<1x8x16xf32> to vector<8x16xf32>
    %211 = vector.broadcast %208 : f32 to vector<8x16xf32>
    %212 = arith.mulf %211, %210 : vector<8x16xf32>
    %213 = arith.addf %205, %212 : vector<8x16xf32>
    %c6_i32_32 = arith.constant 6 : i32
    %214 = arith.addi %167, %c6_i32_32 : i32
    %215 = arith.index_cast %214 : i32 to index
    %216 = memref.load %arg2[%215] : memref<64xf32, #tpu.memory_space<smem>>
    %217 = vector.extract_strided_slice %37 {offsets = [6, 0, 0], sizes = [1, 8, 16], strides = [1, 1, 1]} : vector<8x8x16xf32> to vector<1x8x16xf32>
    %218 = vector.shape_cast %217 : vector<1x8x16xf32> to vector<8x16xf32>
    %219 = vector.broadcast %216 : f32 to vector<8x16xf32>
    %220 = arith.mulf %219, %218 : vector<8x16xf32>
    %221 = arith.addf %213, %220 : vector<8x16xf32>
    %c7_i32_33 = arith.constant 7 : i32
    %222 = arith.addi %167, %c7_i32_33 : i32
    %223 = arith.index_cast %222 : i32 to index
    %224 = memref.load %arg2[%223] : memref<64xf32, #tpu.memory_space<smem>>
    %225 = vector.extract_strided_slice %37 {offsets = [7, 0, 0], sizes = [1, 8, 16], strides = [1, 1, 1]} : vector<8x8x16xf32> to vector<1x8x16xf32>
    %226 = vector.shape_cast %225 : vector<1x8x16xf32> to vector<8x16xf32>
    %227 = vector.broadcast %224 : f32 to vector<8x16xf32>
    %228 = arith.mulf %227, %226 : vector<8x16xf32>
    %229 = arith.addf %221, %228 : vector<8x16xf32>
    %c32_i32_34 = arith.constant 32 : i32
    %230 = arith.muli %arg0, %c32_i32_34 : i32
    %c24_i32 = arith.constant 24 : i32
    %231 = arith.addi %230, %c24_i32 : i32
    %232 = arith.index_cast %231 : i32 to index
    %233 = memref.load %arg2[%232] : memref<64xf32, #tpu.memory_space<smem>>
    %234 = vector.extract_strided_slice %37 {offsets = [0, 0, 0], sizes = [1, 8, 16], strides = [1, 1, 1]} : vector<8x8x16xf32> to vector<1x8x16xf32>
    %235 = vector.shape_cast %234 : vector<1x8x16xf32> to vector<8x16xf32>
    %236 = vector.broadcast %233 : f32 to vector<8x16xf32>
    %237 = arith.mulf %236, %235 : vector<8x16xf32>
    %c1_i32_35 = arith.constant 1 : i32
    %238 = arith.addi %231, %c1_i32_35 : i32
    %239 = arith.index_cast %238 : i32 to index
    %240 = memref.load %arg2[%239] : memref<64xf32, #tpu.memory_space<smem>>
    %241 = vector.extract_strided_slice %37 {offsets = [1, 0, 0], sizes = [1, 8, 16], strides = [1, 1, 1]} : vector<8x8x16xf32> to vector<1x8x16xf32>
    %242 = vector.shape_cast %241 : vector<1x8x16xf32> to vector<8x16xf32>
    %243 = vector.broadcast %240 : f32 to vector<8x16xf32>
    %244 = arith.mulf %243, %242 : vector<8x16xf32>
    %245 = arith.addf %237, %244 : vector<8x16xf32>
    %c2_i32_36 = arith.constant 2 : i32
    %246 = arith.addi %231, %c2_i32_36 : i32
    %247 = arith.index_cast %246 : i32 to index
    %248 = memref.load %arg2[%247] : memref<64xf32, #tpu.memory_space<smem>>
    %249 = vector.extract_strided_slice %37 {offsets = [2, 0, 0], sizes = [1, 8, 16], strides = [1, 1, 1]} : vector<8x8x16xf32> to vector<1x8x16xf32>
    %250 = vector.shape_cast %249 : vector<1x8x16xf32> to vector<8x16xf32>
    %251 = vector.broadcast %248 : f32 to vector<8x16xf32>
    %252 = arith.mulf %251, %250 : vector<8x16xf32>
    %253 = arith.addf %245, %252 : vector<8x16xf32>
    %c3_i32_37 = arith.constant 3 : i32
    %254 = arith.addi %231, %c3_i32_37 : i32
    %255 = arith.index_cast %254 : i32 to index
    %256 = memref.load %arg2[%255] : memref<64xf32, #tpu.memory_space<smem>>
    %257 = vector.extract_strided_slice %37 {offsets = [3, 0, 0], sizes = [1, 8, 16], strides = [1, 1, 1]} : vector<8x8x16xf32> to vector<1x8x16xf32>
    %258 = vector.shape_cast %257 : vector<1x8x16xf32> to vector<8x16xf32>
    %259 = vector.broadcast %256 : f32 to vector<8x16xf32>
    %260 = arith.mulf %259, %258 : vector<8x16xf32>
    %261 = arith.addf %253, %260 : vector<8x16xf32>
    %c4_i32_38 = arith.constant 4 : i32
    %262 = arith.addi %231, %c4_i32_38 : i32
    %263 = arith.index_cast %262 : i32 to index
    %264 = memref.load %arg2[%263] : memref<64xf32, #tpu.memory_space<smem>>
    %265 = vector.extract_strided_slice %37 {offsets = [4, 0, 0], sizes = [1, 8, 16], strides = [1, 1, 1]} : vector<8x8x16xf32> to vector<1x8x16xf32>
    %266 = vector.shape_cast %265 : vector<1x8x16xf32> to vector<8x16xf32>
    %267 = vector.broadcast %264 : f32 to vector<8x16xf32>
    %268 = arith.mulf %267, %266 : vector<8x16xf32>
    %269 = arith.addf %261, %268 : vector<8x16xf32>
    %c5_i32_39 = arith.constant 5 : i32
    %270 = arith.addi %231, %c5_i32_39 : i32
    %271 = arith.index_cast %270 : i32 to index
    %272 = memref.load %arg2[%271] : memref<64xf32, #tpu.memory_space<smem>>
    %273 = vector.extract_strided_slice %37 {offsets = [5, 0, 0], sizes = [1, 8, 16], strides = [1, 1, 1]} : vector<8x8x16xf32> to vector<1x8x16xf32>
    %274 = vector.shape_cast %273 : vector<1x8x16xf32> to vector<8x16xf32>
    %275 = vector.broadcast %272 : f32 to vector<8x16xf32>
    %276 = arith.mulf %275, %274 : vector<8x16xf32>
    %277 = arith.addf %269, %276 : vector<8x16xf32>
    %c6_i32_40 = arith.constant 6 : i32
    %278 = arith.addi %231, %c6_i32_40 : i32
    %279 = arith.index_cast %278 : i32 to index
    %280 = memref.load %arg2[%279] : memref<64xf32, #tpu.memory_space<smem>>
    %281 = vector.extract_strided_slice %37 {offsets = [6, 0, 0], sizes = [1, 8, 16], strides = [1, 1, 1]} : vector<8x8x16xf32> to vector<1x8x16xf32>
    %282 = vector.shape_cast %281 : vector<1x8x16xf32> to vector<8x16xf32>
    %283 = vector.broadcast %280 : f32 to vector<8x16xf32>
    %284 = arith.mulf %283, %282 : vector<8x16xf32>
    %285 = arith.addf %277, %284 : vector<8x16xf32>
    %c7_i32_41 = arith.constant 7 : i32
    %286 = arith.addi %231, %c7_i32_41 : i32
    %287 = arith.index_cast %286 : i32 to index
    %288 = memref.load %arg2[%287] : memref<64xf32, #tpu.memory_space<smem>>
    %289 = vector.extract_strided_slice %37 {offsets = [7, 0, 0], sizes = [1, 8, 16], strides = [1, 1, 1]} : vector<8x8x16xf32> to vector<1x8x16xf32>
    %290 = vector.shape_cast %289 : vector<1x8x16xf32> to vector<8x16xf32>
    %291 = vector.broadcast %288 : f32 to vector<8x16xf32>
    %292 = arith.mulf %291, %290 : vector<8x16xf32>
    %293 = arith.addf %285, %292 : vector<8x16xf32>
    %294 = vector.shape_cast %101 : vector<8x16xf32> to vector<1x8x16xf32>
    %295 = vector.shape_cast %165 : vector<8x16xf32> to vector<1x8x16xf32>
    %296 = vector.shape_cast %229 : vector<8x16xf32> to vector<1x8x16xf32>
    %297 = vector.shape_cast %293 : vector<8x16xf32> to vector<1x8x16xf32>
    %298 = tpu.concatenate %294, %295, %296, %297 in 0 : vector<1x8x16xf32>, vector<1x8x16xf32>, vector<1x8x16xf32>, vector<1x8x16xf32> -> vector<4x8x16xf32>
    %299 = vector.shape_cast %36 : vector<4x8xf32> to vector<4x8x1xf32>
    %300 = vector.shape_cast %33 : vector<4x16xf32> to vector<4x1x16xf32>
    %301 = vector.broadcast %299 : vector<4x8x1xf32> to vector<4x8x16xf32>
    %302 = vector.broadcast %300 : vector<4x1x16xf32> to vector<4x8x16xf32>
    %303 = arith.addf %301, %302 : vector<4x8x16xf32>
    %304 = arith.addf %303, %298 : vector<4x8x16xf32>
    %cst_42 = arith.constant 0.000000e+00 : f32
    %305 = vector.broadcast %cst_42 : f32 to vector<4x8x16xf32>
    %306 = arith.cmpf ogt, %304, %305 : vector<4x8x16xf32>
    %cst_43 = arith.constant 2.000000e-01 : f32
    %307 = vector.broadcast %cst_43 : f32 to vector<4x8x16xf32>
    %308 = arith.mulf %307, %304 : vector<4x8x16xf32>
    %309 = arith.select %306, %304, %308 : vector<4x8x16xi1>, vector<4x8x16xf32>
    %c0_44 = arith.constant 0 : index
    %c0_45 = arith.constant 0 : index
    %310 = vector.load %arg5[%c0_44, %c0_45] : memref<8x16xf32, #tpu.memory_space<vmem>>, vector<8x16xf32>
    %311 = vector.shape_cast %310 : vector<8x16xf32> to vector<1x8x16xf32>
    %312 = vector.broadcast %311 : vector<1x8x16xf32> to vector<4x8x16xf32>
    %313 = arith.addf %309, %312 : vector<4x8x16xf32>
    %cst_46 = arith.constant dense<0xFF800000> : vector<4x8xf32>
    %314 = vector.multi_reduction <maximumf>, %313, %cst_46 [2] : vector<4x8x16xf32> to vector<4x8xf32>
    %315 = vector.shape_cast %314 : vector<4x8xf32> to vector<4x8x1xf32>
    %316 = vector.broadcast %315 : vector<4x8x1xf32> to vector<4x8x16xf32>
    %317 = arith.subf %313, %316 : vector<4x8x16xf32>
    %318 = math.exp %317 : vector<4x8x16xf32>
    %cst_47 = arith.constant dense<0.000000e+00> : vector<4x8xf32>
    %319 = vector.multi_reduction <add>, %318, %cst_47 [2] : vector<4x8x16xf32> to vector<4x8xf32>
    %320 = vector.shape_cast %319 : vector<4x8xf32> to vector<4x8x1xf32>
    %321 = tpu.reciprocal %320 {approx = true} : vector<4x8x1xf32> -> vector<4x8x1xf32>
    %322 = vector.broadcast %321 : vector<4x8x1xf32> to vector<4x8x16xf32>
    %323 = arith.mulf %318, %322 : vector<4x8x16xf32>
    %324 = arith.truncf %323 : vector<4x8x16xf32> to vector<4x8x16xbf16>
    %c0_48 = arith.constant 0 : index
    %c0_49 = arith.constant 0 : index
    %325 = vector.load %arg12[%c0_48, %c0_49] : memref<16x32xbf16, #tpu.memory_space<vmem>>, vector<16x32xbf16>
    %326 = vector.extract_strided_slice %325 {offsets = [0, 0], sizes = [16, 8], strides = [1, 1]} : vector<16x32xbf16> to vector<16x8xbf16>
    %327 = vector.extract_strided_slice %324 {offsets = [0, 0, 0], sizes = [1, 8, 16], strides = [1, 1, 1]} : vector<4x8x16xbf16> to vector<1x8x16xbf16>
    %328 = vector.shape_cast %327 : vector<1x8x16xbf16> to vector<8x16xbf16>
    %cst_50 = arith.constant dense<0.000000e+00> : vector<8x8xf32>
    %329 = tpu.matmul %328, %326, %cst_50 {dimension_numbers = #tpu.dot_dimension_numbers<[1], [0], [0], [1], [0, 0, 1, 1], [], []>} : vector<8x16xbf16>, vector<16x8xbf16>, vector<8x8xf32> -> vector<8x8xf32>
    %330 = vector.extract_strided_slice %325 {offsets = [0, 8], sizes = [16, 8], strides = [1, 1]} : vector<16x32xbf16> to vector<16x8xbf16>
    %331 = vector.extract_strided_slice %324 {offsets = [1, 0, 0], sizes = [1, 8, 16], strides = [1, 1, 1]} : vector<4x8x16xbf16> to vector<1x8x16xbf16>
    %332 = vector.shape_cast %331 : vector<1x8x16xbf16> to vector<8x16xbf16>
    %cst_51 = arith.constant dense<0.000000e+00> : vector<8x8xf32>
    %333 = tpu.matmul %332, %330, %cst_51 {dimension_numbers = #tpu.dot_dimension_numbers<[1], [0], [0], [1], [0, 0, 1, 1], [], []>} : vector<8x16xbf16>, vector<16x8xbf16>, vector<8x8xf32> -> vector<8x8xf32>
    %334 = vector.extract_strided_slice %325 {offsets = [0, 16], sizes = [16, 8], strides = [1, 1]} : vector<16x32xbf16> to vector<16x8xbf16>
    %335 = vector.extract_strided_slice %324 {offsets = [2, 0, 0], sizes = [1, 8, 16], strides = [1, 1, 1]} : vector<4x8x16xbf16> to vector<1x8x16xbf16>
    %336 = vector.shape_cast %335 : vector<1x8x16xbf16> to vector<8x16xbf16>
    %cst_52 = arith.constant dense<0.000000e+00> : vector<8x8xf32>
    %337 = tpu.matmul %336, %334, %cst_52 {dimension_numbers = #tpu.dot_dimension_numbers<[1], [0], [0], [1], [0, 0, 1, 1], [], []>} : vector<8x16xbf16>, vector<16x8xbf16>, vector<8x8xf32> -> vector<8x8xf32>
    %338 = vector.extract_strided_slice %325 {offsets = [0, 24], sizes = [16, 8], strides = [1, 1]} : vector<16x32xbf16> to vector<16x8xbf16>
    %339 = vector.extract_strided_slice %324 {offsets = [3, 0, 0], sizes = [1, 8, 16], strides = [1, 1, 1]} : vector<4x8x16xbf16> to vector<1x8x16xbf16>
    %340 = vector.shape_cast %339 : vector<1x8x16xbf16> to vector<8x16xbf16>
    %cst_53 = arith.constant dense<0.000000e+00> : vector<8x8xf32>
    %341 = tpu.matmul %340, %338, %cst_53 {dimension_numbers = #tpu.dot_dimension_numbers<[1], [0], [0], [1], [0, 0, 1, 1], [], []>} : vector<8x16xbf16>, vector<16x8xbf16>, vector<8x8xf32> -> vector<8x8xf32>
    %342 = tpu.concatenate %329, %333, %337, %341 in 1 : vector<8x8xf32>, vector<8x8xf32>, vector<8x8xf32>, vector<8x8xf32> -> vector<8x32xf32>
    %343 = vector.broadcast %13 : vector<1x32xf32> to vector<8x32xf32>
    %344 = arith.addf %342, %343 : vector<8x32xf32>
    %cst_54 = arith.constant 0.000000e+00 : f32
    %345 = vector.broadcast %cst_54 : f32 to vector<8x32xf32>
    %346 = arith.cmpf ogt, %344, %345 : vector<8x32xf32>
    %cst_55 = arith.constant 0.000000e+00 : f32
    %347 = vector.broadcast %cst_55 : f32 to vector<8x32xf32>
    %348 = arith.minimumf %344, %347 : vector<8x32xf32>
    %349 = math.exp %348 : vector<8x32xf32>
    %cst_56 = arith.constant 1.000000e+00 : f32
    %350 = vector.broadcast %cst_56 : f32 to vector<8x32xf32>
    %351 = arith.subf %349, %350 : vector<8x32xf32>
    %352 = arith.select %346, %344, %351 : vector<8x32xi1>, vector<8x32xf32>
    %353 = arith.index_cast %30 : i32 to index
    %c0_57 = arith.constant 0 : index
    %354 = vector.load %arg11[%353, %c0_57] : memref<16x32xf32, #tpu.memory_space<vmem>>, vector<8x32xf32>
    tpu.vector_store %arg11[%353, %c0_57], %352 {strides = array<i32>} : memref<16x32xf32, #tpu.memory_space<vmem>>, vector<8x32xf32>,
    %c1_i32_58 = arith.constant 1 : i32
    %355 = arith.cmpi eq, %arg1, %c1_i32_58 : i32
    %356 = arith.extui %355 : i1 to i32
    %c0_i32_59 = arith.constant 0 : i32
    %357 = arith.cmpi ne, %356, %c0_i32_59 : i32
    scf.if %357 {
      %c0_63 = arith.constant 0 : index
      %c0_64 = arith.constant 0 : index
      %363 = vector.load %arg11[%c0_63, %c0_64] : memref<16x32xf32, #tpu.memory_space<vmem>>, vector<16x32xf32>
      %c0_65 = arith.constant 0 : index
      %c0_66 = arith.constant 0 : index
      %364 = vector.load %arg10[%c0_65, %c0_66] : memref<16x32xf32, #tpu.memory_space<vmem>>, vector<16x32xf32>
      tpu.vector_store %arg10[%c0_65, %c0_66], %363 {strides = array<i32>} : memref<16x32xf32, #tpu.memory_space<vmem>>, vector<16x32xf32>,
    } else {
    }
    %c1_i32_60 = arith.constant 1 : i32
    %358 = arith.cmpi eq, %arg0, %c1_i32_60 : i32
    %c1_i32_61 = arith.constant 1 : i32
    %359 = arith.cmpi eq, %arg1, %c1_i32_61 : i32
    %360 = arith.andi %358, %359 : i1
    %361 = arith.extui %360 : i1 to i32
    %c0_i32_62 = arith.constant 0 : i32
    %362 = arith.cmpi ne, %361, %c0_i32_62 : i32
    scf.if %362 {
      %c0_63 = arith.constant 0 : index
      %c0_64 = arith.constant 0 : index
      %363 = vector.load %arg11[%c0_63, %c0_64] : memref<16x32xf32, #tpu.memory_space<vmem>>, vector<16x32xf32>
      %cst_65 = arith.constant dense<0.000000e+00> : vector<32xf32>
      %364 = vector.multi_reduction <add>, %363, %cst_65 [0] : vector<16x32xf32> to vector<32xf32>
      %365 = vector.shape_cast %364 : vector<32xf32> to vector<1x32xf32>
      %cst_66 = arith.constant 1.600000e+01 : f32
      %366 = vector.broadcast %cst_66 : f32 to vector<1x32xf32>
      %367 = arith.divf %365, %366 : vector<1x32xf32>
      %368 = vector.extract_strided_slice %0 {offsets = [24, 64], sizes = [32, 32], strides = [1, 1]} : vector<96x128xf32> to vector<32x32xf32>
      %cst_67 = arith.constant dense<0.000000e+00> : vector<1x32xf32>
      %369 = tpu.matmul %367, %368, %cst_67 {dimension_numbers = #tpu.dot_dimension_numbers<[1], [0], [0], [1], [0, 0, 1, 1], [], []>} : vector<1x32xf32>, vector<32x32xf32>, vector<1x32xf32> -> vector<1x32xf32>
      %370 = vector.extract_strided_slice %0 {offsets = [19, 0], sizes = [1, 32], strides = [1, 1]} : vector<96x128xf32> to vector<1x32xf32>
      %371 = arith.addf %369, %370 : vector<1x32xf32>
      %cst_68 = arith.constant 0.000000e+00 : f32
      %372 = vector.broadcast %cst_68 : f32 to vector<1x32xf32>
      %373 = arith.maximumf %371, %372 : vector<1x32xf32>
      %374 = vector.extract_strided_slice %0 {offsets = [56, 0], sizes = [32, 48], strides = [1, 1]} : vector<96x128xf32> to vector<32x48xf32>
      %cst_69 = arith.constant dense<0.000000e+00> : vector<1x48xf32>
      %375 = tpu.matmul %373, %374, %cst_69 {dimension_numbers = #tpu.dot_dimension_numbers<[1], [0], [0], [1], [0, 0, 1, 1], [], []>} : vector<1x32xf32>, vector<32x48xf32>, vector<1x48xf32> -> vector<1x48xf32>
      %376 = vector.extract_strided_slice %0 {offsets = [20, 0], sizes = [1, 48], strides = [1, 1]} : vector<96x128xf32> to vector<1x48xf32>
      %377 = arith.addf %375, %376 : vector<1x48xf32>
      %c0_70 = arith.constant 0 : index
      %c0_71 = arith.constant 0 : index
      %378 = vector.load %arg8[%c0_70, %c0_71] : memref<1x48xf32, #tpu.memory_space<vmem>>, vector<1x48xf32>
      tpu.vector_store %arg8[%c0_70, %c0_71], %377 {strides = array<i32>} : memref<1x48xf32, #tpu.memory_space<vmem>>, vector<1x48xf32>,
    } else {
    }
    return
  }
  func.func @transform_0(%arg0: i32, %arg1: i32, %arg2: memref<64xf32, #tpu.memory_space<smem>>) -> (i32, i32) {
    %c0_i32 = arith.constant 0 : i32
    %c0_i32_0 = arith.constant 0 : i32
    %c0_i32_1 = arith.constant 0 : i32
    return %c0_i32, %c0_i32_0 : i32, i32
  }
  func.func @transform_1(%arg0: i32, %arg1: i32, %arg2: memref<64xf32, #tpu.memory_space<smem>>) -> (i32, i32, i32) {
    %c0_i32 = arith.constant 0 : i32
    %c0_i32_0 = arith.constant 0 : i32
    %c0_i32_1 = arith.constant 0 : i32
    return %c0_i32, %arg1, %c0_i32_0 : i32, i32, i32
  }
  func.func @transform_2(%arg0: i32, %arg1: i32, %arg2: memref<64xf32, #tpu.memory_space<smem>>) -> (i32, i32) {
    %c0_i32 = arith.constant 0 : i32
    %c0_i32_0 = arith.constant 0 : i32
    return %arg1, %c0_i32 : i32, i32
  }
  func.func @transform_3(%arg0: i32, %arg1: i32, %arg2: memref<64xf32, #tpu.memory_space<smem>>) -> (i32, i32) {
    %c0_i32 = arith.constant 0 : i32
    %c0_i32_0 = arith.constant 0 : i32
    %c0_i32_1 = arith.constant 0 : i32
    return %c0_i32, %c0_i32_0 : i32, i32
  }
  func.func @transform_4(%arg0: i32, %arg1: i32, %arg2: memref<64xf32, #tpu.memory_space<smem>>) -> (i32, i32) {
    %c0_i32 = arith.constant 0 : i32
    %c0_i32_0 = arith.constant 0 : i32
    %c0_i32_1 = arith.constant 0 : i32
    return %c0_i32, %c0_i32_0 : i32, i32
  }
  func.func @transform_5(%arg0: i32, %arg1: i32, %arg2: memref<64xf32, #tpu.memory_space<smem>>) -> (i32, i32) {
    %c0_i32 = arith.constant 0 : i32
    %c0_i32_0 = arith.constant 0 : i32
    %c0_i32_1 = arith.constant 0 : i32
    return %c0_i32, %c0_i32_0 : i32, i32
  }
  func.func @transform_6(%arg0: i32, %arg1: i32, %arg2: memref<64xf32, #tpu.memory_space<smem>>) -> (i32, i32) {
    %c0_i32 = arith.constant 0 : i32
    %c0_i32_0 = arith.constant 0 : i32
    %c0_i32_1 = arith.constant 0 : i32
    return %c0_i32, %c0_i32_0 : i32, i32
  }
}

</mosaic_0001>

<llo_original>
// kernel: tpu_custom_call.1
$region0: #{tpu_custom_call.1}
  #allocation0 [shape = 'u32[]', space=smem, size = 0x4, offset = 0x4, fixed_abs, tag = 'smem constant byte address 0x4 - core index']
  #allocation1 [shape = 'u32[72,128]{1,0:T(1,128)}', space=vmem, size = 0x9000, scoped, tag = 'internal scratch']
  #allocation2 [shape = 'f32[16,32]{1,0:T(8,128)}', space=vmem, size = 0x2000, scoped, tag = 'scratch operand']
  #allocation3 [shape = 'f32[16,32]{1,0:T(8,128)}', space=vmem, size = 0x2000, scoped, tag = 'scratch operand']
  #allocation4 [shape = 'bf16[16,32]{1,0:T(8,128)(2,1)}', space=vmem, size = 0x1000, scoped, tag = 'scratch operand']
  #allocation5 [shape = 'f32[4,16]{1,0:T(4,128)}', space=vmem, size = 0x800, scoped, tag = 'scratch operand']
  #allocation6 [shape = 's32[1]{0}', space=sflag, size = 0x4, scoped, tag = 'scoped memory for tpu_custom_call.1']
  #allocation7 [shape = 'u8[512]{0}', space=smem, size = 0x200, scoped, tag = 'prefetched SMEM operand 0']
  %s0 = inlined_call_operand.hbm [shape: f32[64], index: 0, kind: input, shape index: {}]
  %s1 = inlined_call_operand.hbm [shape: f32[16,16], index: 1, kind: input, shape index: {}]
  %s2 = inlined_call_operand.hbm [shape: f32[8,16,16], index: 2, kind: input, shape index: {}]
  %s3 = inlined_call_operand.hbm [shape: f32[16,16], index: 3, kind: input, shape index: {}]
  %s4 = inlined_call_operand.vmem [shape: f32[2,32], index: 4, kind: input, shape index: {}]
  %s5 = inlined_call_operand.hbm [shape: f32[96,128], index: 5, kind: input, shape index: {}]
  %s6 = inlined_call_operand.hbm [shape: f32[1,48], index: 6, kind: output, shape index: {0}]
  %s7 = inlined_call_operand.hbm [shape: f32[2,32], index: 7, kind: output, shape index: {1}]
  %8 = xla_tuple %s6, %s7
  %s9 = sld [smem:[#allocation0]]
  $region93: #{tpu_custom_call.1} parent=0
    _
  %s11 = ssub.s32 1, %s9
  %s12 = scalar_select 0, %s11, %s9
  %s14 = sshll.u32 %s0, 4
  %s15 = int_to_ptr.hbm [resolvable:$true] %s14
  %17 = dma.hbm_to_smem %s15, 16, [#allocation7], [#allocation6]
  %19 = dma.done [#allocation6], 16
  %20 = sfence
  $region1: #{tpu_custom_call.1} parent=0
    #allocation8 [shape = 'u8[8192]{0}', space=vmem, size = 0x2000, scoped, tag = 'input window, operand 1, single buffered']
    #allocation9 [shape = 's32[2]{0}', space=sflag, size = 0x8, scoped, tag = 'scoped memory for tpu_custom_call.1']
    #allocation10 [shape = 's32[2]{0}', space=sflag, size = 0x8, scoped, tag = 'scoped memory for tpu_custom_call.1']
    #allocation11 [shape = 'u8[65536]{0}', space=vmem, size = 0x10000, scoped, tag = 'input window, operand 2']
    #allocation12 [shape = 's32[2]{0}', space=sflag, size = 0x8, scoped, tag = 'scoped memory for tpu_custom_call.1']
    #allocation13 [shape = 'u8[8192]{0}', space=vmem, size = 0x2000, scoped, tag = 'input window, operand 3']
    #allocation14 [shape = 'u8[49152]{0}', space=vmem, size = 0xc000, scoped, tag = 'input window, operand 5, single buffered']
    #allocation15 [shape = 's32[1]{0}', space=sflag, size = 0x4, scoped, tag = 'scoped memory for tpu_custom_call.1']
    #allocation16 [shape = 'u8[512]{0}', space=vmem, size = 0x400, scoped, tag = 'output window, operand 0, single buffered']
    #allocation17 [shape = 'u8[1024]{0}', space=vmem, size = 0x400, scoped, tag = 'output window, operand 1, single buffered']
    #allocation18 [shape = 's32[1]{0}', space=sflag, size = 0x4, scoped, tag = 'scoped memory for tpu_custom_call.1']
    %21 = vsyncpa [#allocation9], 0
    %22 = vsyncpa [#allocation12], 0
    %s23 = scalar_lea.sflag [#allocation12], 1
    %24 = vsyncpa %s23, 0
    %25 = vsyncpa [#allocation15], 0
    %26 = vsyncpa [#allocation10], 0
    %27 = vsyncpa [#allocation18], 0
    loop: start=0, step=1, limit=6
    $region2: #{tpu_custom_call.1} parent=1 // loop_pre_header
      _
    $region3: #{tpu_custom_call.1} parent=1 // loop_header
      %s29 = sphi 0, %s33
      %p30 = scmp.ge.s32.totalorder %s29, 6
      %s36 = sphi 0, %s48
      %s37 = sphi 0, %s44
      %s38 = sphi 0, %s36
      %s39 = sphi 0, %s37
      %s40 = sphi 0, %s38
      %s41 = sphi 0, %s39
      %s49 = sphi 0, %s49
      %s51 = sphi 0, %s49
      %s52 = sphi 0, %s51
      %s66 = sphi 0, %s52
      %s72 = sphi 0, %s74
      %s75 = sphi 0, %s72
      %s76 = sphi 0, %s75
      %s92 = sphi 0, %s76
      %s98 = sphi 0, %s100
      %s101 = sphi 0, %s98
      %s102 = sphi 0, %s101
      %s118 = sphi 0, %s102
      %s122 = sphi 0, %s122
      %s124 = sphi 0, %s122
      %s125 = sphi 0, %s124
      %s139 = sphi 0, %s125
      %s143 = sphi 0, %s143
      %s145 = sphi 0, %s143
      %s146 = sphi 0, %s145
      %s160 = sphi 0, %s146
      %s164 = sphi 0, %s164
      %s166 = sphi 0, %s164
      %s167 = sphi 0, %s166
      %s181 = sphi 0, %s167
      %s185 = sphi 0, %s185
      %s187 = sphi 0, %s185
      %s188 = sphi 0, %s187
      %s202 = sphi 0, %s188
    $region4: #{tpu_custom_call.1} parent=1 // loop_header_branch
      %32 = sbr.rel (%p30) target = $region8
    $region5: #{tpu_custom_call.1} parent=1 // loop_body
      %s34 = ssub.s32 %s29, 1
      %s35 = ssub.s32 %s29, 2
      %s42 = sadd.s32 1, %s37
      %p43 = scmp.ge.s32.totalorder %s42, 2
      %s44 = scalar_select %p43, 0, %s42
      %s45 = sadd.s32 1, %s36
      %s46 = scalar_select %p43, %s45, %s36
      %p47 = scmp.ge.s32.totalorder %s46, 2
      %s48 = scalar_select %p47, 0, %s46
      %s50 = sadd.s32 %s49, 1
      %p53 = scmp.eq.s32.totalorder %s29, 3
      %p54 = scmp.ne.s32.totalorder %s49, %s51
      %p55 = scmp.eq.s32.totalorder %s29, 0
      %p56 = por %p54, %p55
      %p57 = scmp.ne.s32.totalorder %s49, %s51
      %p58 = scmp.eq.s32.totalorder %s34, 3
      %p59 = por %p57, %p58
      %p60 = scmp.ne.s32.totalorder %s51, %s52
      %p61 = scmp.eq.s32.totalorder %s34, 0
      %p62 = por %p60, %p61
      %p63 = scmp.ne.s32.totalorder %s51, %s52
      %p64 = scmp.eq.s32.totalorder %s35, 3
      %p65 = por %p63, %p64
      %p67 = scmp.ne.s32.totalorder %s52, %s66
      %p68 = scmp.eq.s32.totalorder %s35, 0
      %p69 = por %p67, %p68
      %s70 = ssub.s32 %s37, %s44
      %p71 = scmp.eq.s32.totalorder %s70, 0
      %s73 = sadd.s32 %s72, 1
      %s74 = scalar_select %p71, %s72, %s73
      %p77 = pneg %p71
      %p78 = scmp.eq.s32.totalorder %s29, 3
      %p79 = por %p77, %p78
      %p80 = scmp.ne.s32.totalorder %s72, %s75
      %p81 = scmp.eq.s32.totalorder %s29, 0
      %p82 = por %p80, %p81
      %p83 = scmp.ne.s32.totalorder %s72, %s75
      %p84 = scmp.eq.s32.totalorder %s34, 3
      %p85 = por %p83, %p84
      %p86 = scmp.ne.s32.totalorder %s75, %s76
      %p87 = scmp.eq.s32.totalorder %s34, 0
      %p88 = por %p86, %p87
      %p89 = scmp.ne.s32.totalorder %s75, %s76
      %p90 = scmp.eq.s32.totalorder %s35, 3
      %p91 = por %p89, %p90
      %p93 = scmp.ne.s32.totalorder %s76, %s92
      %p94 = scmp.eq.s32.totalorder %s35, 0
      %p95 = por %p93, %p94
      %s96 = ssub.s32 %s37, %s44
      %p97 = scmp.eq.s32.totalorder %s96, 0
      %s99 = sadd.s32 %s98, 1
      %s100 = scalar_select %p97, %s98, %s99
      %p103 = pneg %p97
      %p104 = scmp.eq.s32.totalorder %s29, 3
      %p105 = por %p103, %p104
      %p106 = scmp.ne.s32.totalorder %s98, %s101
      %p107 = scmp.eq.s32.totalorder %s29, 0
      %p108 = por %p106, %p107
      %p109 = scmp.ne.s32.totalorder %s98, %s101
      %p110 = scmp.eq.s32.totalorder %s34, 3
      %p111 = por %p109, %p110
      %p112 = scmp.ne.s32.totalorder %s101, %s102
      %p113 = scmp.eq.s32.totalorder %s34, 0
      %p114 = por %p112, %p113
      %p115 = scmp.ne.s32.totalorder %s101, %s102
      %p116 = scmp.eq.s32.totalorder %s35, 3
      %p117 = por %p115, %p116
      %p119 = scmp.ne.s32.totalorder %s102, %s118
      %p120 = scmp.eq.s32.totalorder %s35, 0
      %p121 = por %p119, %p120
      %s123 = sadd.s32 %s122, 1
      %p126 = scmp.eq.s32.totalorder %s29, 3
      %p127 = scmp.ne.s32.totalorder %s122, %s124
      %p128 = scmp.eq.s32.totalorder %s29, 0
      %p129 = por %p127, %p128
      %p130 = scmp.ne.s32.totalorder %s122, %s124
      %p131 = scmp.eq.s32.totalorder %s34, 3
      %p132 = por %p130, %p131
      %p133 = scmp.ne.s32.totalorder %s124, %s125
      %p134 = scmp.eq.s32.totalorder %s34, 0
      %p135 = por %p133, %p134
      %p136 = scmp.ne.s32.totalorder %s124, %s125
      %p137 = scmp.eq.s32.totalorder %s35, 3
      %p138 = por %p136, %p137
      %p140 = scmp.ne.s32.totalorder %s125, %s139
      %p141 = scmp.eq.s32.totalorder %s35, 0
      %p142 = por %p140, %p141
      %s144 = sadd.s32 %s143, 1
      %p147 = scmp.eq.s32.totalorder %s29, 3
      %p148 = scmp.ne.s32.totalorder %s143, %s145
      %p149 = scmp.eq.s32.totalorder %s29, 0
      %p150 = por %p148, %p149
      %p151 = scmp.ne.s32.totalorder %s143, %s145
      %p152 = scmp.eq.s32.totalorder %s34, 3
      %p153 = por %p151, %p152
      %p154 = scmp.ne.s32.totalorder %s145, %s146
      %p155 = scmp.eq.s32.totalorder %s34, 0
      %p156 = por %p154, %p155
      %p157 = scmp.ne.s32.totalorder %s145, %s146
      %p158 = scmp.eq.s32.totalorder %s35, 3
      %p159 = por %p157, %p158
      %p161 = scmp.ne.s32.totalorder %s146, %s160
      %p162 = scmp.eq.s32.totalorder %s35, 0
      %p163 = por %p161, %p162
      %s165 = sadd.s32 %s164, 1
      %p168 = scmp.eq.s32.totalorder %s29, 3
      %p169 = scmp.ne.s32.totalorder %s164, %s166
      %p170 = scmp.eq.s32.totalorder %s29, 0
      %p171 = por %p169, %p170
      %p172 = scmp.ne.s32.totalorder %s164, %s166
      %p173 = scmp.eq.s32.totalorder %s34, 3
      %p174 = por %p172, %p173
      %p175 = scmp.ne.s32.totalorder %s166, %s167
      %p176 = scmp.eq.s32.totalorder %s34, 0
      %p177 = por %p175, %p176
      %p178 = scmp.ne.s32.totalorder %s166, %s167
      %p179 = scmp.eq.s32.totalorder %s35, 3
      %p180 = por %p178, %p179
      %p182 = scmp.ne.s32.totalorder %s167, %s181
      %p183 = scmp.eq.s32.totalorder %s35, 0
      %p184 = por %p182, %p183
      %s186 = sadd.s32 %s185, 1
      %p189 = scmp.eq.s32.totalorder %s29, 3
      %p190 = scmp.ne.s32.totalorder %s185, %s187
      %p191 = scmp.eq.s32.totalorder %s29, 0
      %p192 = por %p190, %p191
      %p193 = scmp.ne.s32.totalorder %s185, %s187
      %p194 = scmp.eq.s32.totalorder %s34, 3
      %p195 = por %p193, %p194
      %p196 = scmp.ne.s32.totalorder %s187, %s188
      %p197 = scmp.eq.s32.totalorder %s34, 0
      %p198 = por %p196, %p197
      %p199 = scmp.ne.s32.totalorder %s187, %s188
      %p200 = scmp.eq.s32.totalorder %s35, 3
      %p201 = por %p199, %p200
      %p203 = scmp.ne.s32.totalorder %s188, %s202
      %p204 = scmp.eq.s32.totalorder %s35, 0
      %p205 = por %p203, %p204
      %p206 = scmp.le.s32.totalorder 1, %s29
      %p207 = scmp.lt.s32.totalorder %s29, 5
      %p208 = pnand %p206, %p207
      %p209 = pneg %p208
      // Predicated region
      $region9: #{tpu_custom_call.1} parent=5 // pred_check
        _
      $region10: #{tpu_custom_call.1} parent=5 // pred_check_branch
        %211 = sbr.rel (%p208) target = $region12
      $region11: #{tpu_custom_call.1} parent=5 // pred_region
        %s212 = ssub.s32 %s29, 1
        // Predicated region
        $region13: #{tpu_custom_call.1} parent=11 // pred_check
          %p213 = pneg %p62
        $region14: #{tpu_custom_call.1} parent=11 // pred_check_branch
          %215 = sbr.rel (%p213) target = $region16
        $region15: #{tpu_custom_call.1} parent=11 // pred_region
          %217 = vsyncadd [#allocation9], 0
          %s218 = sshll.u32 %s1, 4
          %s219 = int_to_ptr.hbm [resolvable:$true] %s218
          %s220 = sshll.u32 [#allocation8], 4
          %s221 = int_to_ptr.vmem [resolvable:$true] %s220
          %226 = dma.hbm_to_vmem [thread:$0]  %s219, 256, %s221, [#allocation9], 128, 128, 8
        $region16: #{tpu_custom_call.1} parent=11 // pred_fallthru
          _
        // Predicated region
        $region17: #{tpu_custom_call.1} parent=11 // pred_check
          %p227 = pneg %p135
        $region18: #{tpu_custom_call.1} parent=11 // pred_check_branch
          %229 = sbr.rel (%p227) target = $region20
        $region19: #{tpu_custom_call.1} parent=11 // pred_region
          _
        $region20: #{tpu_custom_call.1} parent=11 // pred_fallthru
          _
        // Predicated region
        $region21: #{tpu_custom_call.1} parent=11 // pred_check
          %p230 = pneg %p156
        $region22: #{tpu_custom_call.1} parent=11 // pred_check_branch
          %232 = sbr.rel (%p230) target = $region24
        $region23: #{tpu_custom_call.1} parent=11 // pred_region
          %234 = vsyncadd [#allocation15], 0
          %s235 = sshll.u32 %s5, 4
          %s236 = int_to_ptr.hbm [resolvable:$true] %s235
          %s237 = sshll.u32 [#allocation14], 4
          %s238 = int_to_ptr.vmem [resolvable:$true] %s237
          %243 = dma.hbm_to_vmem [thread:$0]  %s236, 1536, %s238, [#allocation15], 128, 128, 8
        $region24: #{tpu_custom_call.1} parent=11 // pred_fallthru
          _
      $region12: #{tpu_custom_call.1} parent=5 // pred_fallthru
        _
      %p244 = scmp.lt.s32.totalorder %s29, 4
      // Predicated region
      $region25: #{tpu_custom_call.1} parent=5 // pred_check
        %p245 = pneg %p244
      $region26: #{tpu_custom_call.1} parent=5 // pred_check_branch
        %247 = sbr.rel (%p245) target = $region28
      $region27: #{tpu_custom_call.1} parent=5 // pred_region
        // Predicated region
        $region29: #{tpu_custom_call.1} parent=27 // pred_check
          %p248 = pneg %p82
        $region30: #{tpu_custom_call.1} parent=27 // pred_check_branch
          %250 = sbr.rel (%p248) target = $region32
        $region31: #{tpu_custom_call.1} parent=27 // pred_region
          %s251 = sand.u32 %s29, 1
          %s252 = scalar_lea.sflag [#allocation12], %s251
          %s253 = sand.u32 %s72, 1
          %s254 = smul.addr %s253, 64
          %s255 = scalar_lea.vmem [#allocation11], %s254
          %257 = vsyncadd %s252, 0
          %s258 = smul.addr %s37, 8
          %s259 = scalar_lea.hbm %s2, %s258
          %s260 = sshll.u32 %s259, 4
          %s261 = int_to_ptr.hbm [resolvable:$true] %s260
          %s262 = sshll.u32 %s255, 4
          %s263 = int_to_ptr.vmem [resolvable:$true] %s262
          %268 = dma.hbm_to_vmem [thread:$0]  %s261, 1024, %s263, %s252, 256, 128, 8
        $region32: #{tpu_custom_call.1} parent=27 // pred_fallthru
          _
        // Predicated region
        $region33: #{tpu_custom_call.1} parent=27 // pred_check
          %p269 = pneg %p108
        $region34: #{tpu_custom_call.1} parent=27 // pred_check_branch
          %271 = sbr.rel (%p269) target = $region36
        $region35: #{tpu_custom_call.1} parent=27 // pred_region
          %s272 = sand.u32 %s29, 1
          %s273 = scalar_lea.sflag [#allocation12], %s272
          %s274 = sand.u32 %s98, 1
          %s275 = smul.addr %s274, 8
          %s276 = scalar_lea.vmem [#allocation13], %s275
          %278 = vsyncadd %s273, 0
          %s279 = smul.addr %s37, 8
          %s280 = scalar_lea.hbm %s3, %s279
          %s282 = sshll.u32 %s280, 4
          %s283 = int_to_ptr.hbm [resolvable:$true] %s282
          %s284 = sshll.u32 %s276, 4
          %s285 = int_to_ptr.vmem [resolvable:$true] %s284
          %287 = dma.hbm_to_vmem [thread:$0]  %s283, 128, %s285, %s273
        $region36: #{tpu_custom_call.1} parent=27 // pred_fallthru
          _
      $region28: #{tpu_custom_call.1} parent=5 // pred_fallthru
        _
      %p288 = scmp.le.s32.totalorder 1, %s29
      %p289 = scmp.lt.s32.totalorder %s29, 5
      %p290 = pnand %p288, %p289
      %p291 = pneg %p290
      // Predicated region
      $region37: #{tpu_custom_call.1} parent=5 // pred_check
        _
      $region38: #{tpu_custom_call.1} parent=5 // pred_check_branch
        %293 = sbr.rel (%p290) target = $region40
      $region39: #{tpu_custom_call.1} parent=5 // pred_region
        %s294 = ssub.s32 %s29, 1
        // Predicated region
        $region41: #{tpu_custom_call.1} parent=39 // pred_check
          %p295 = pneg %p62
        $region42: #{tpu_custom_call.1} parent=39 // pred_check_branch
          %297 = sbr.rel (%p295) target = $region44
        $region43: #{tpu_custom_call.1} parent=39 // pred_region
          %299 = dma.done [#allocation9], 256
        $region44: #{tpu_custom_call.1} parent=39 // pred_fallthru
          _
        %s300 = sand.u32 %s34, 1
        %s301 = scalar_lea.sflag [#allocation12], %s300
        %s302 = sand.u32 %s75, 1
        %s303 = smul.addr %s302, 64
        %s304 = scalar_lea.vmem [#allocation11], %s303
        // Predicated region
        $region45: #{tpu_custom_call.1} parent=39 // pred_check
          %p305 = pneg %p88
        $region46: #{tpu_custom_call.1} parent=39 // pred_check_branch
          %307 = sbr.rel (%p305) target = $region48
        $region47: #{tpu_custom_call.1} parent=39 // pred_region
          %309 = dma.done %s301, 1024
        $region48: #{tpu_custom_call.1} parent=39 // pred_fallthru
          _
        %s310 = sand.u32 %s34, 1
        %s311 = scalar_lea.sflag [#allocation12], %s310
        %s312 = sand.u32 %s101, 1
        %s313 = smul.addr %s312, 8
        %s314 = scalar_lea.vmem [#allocation13], %s313
        // Predicated region
        $region49: #{tpu_custom_call.1} parent=39 // pred_check
          %p315 = pneg %p114
        $region50: #{tpu_custom_call.1} parent=39 // pred_check_branch
          %317 = sbr.rel (%p315) target = $region52
        $region51: #{tpu_custom_call.1} parent=39 // pred_region
          %319 = dma.done %s311, 128
        $region52: #{tpu_custom_call.1} parent=39 // pred_fallthru
          _
        // Predicated region
        $region53: #{tpu_custom_call.1} parent=39 // pred_check
          %p320 = pneg %p156
        $region54: #{tpu_custom_call.1} parent=39 // pred_check_branch
          %322 = sbr.rel (%p320) target = $region56
        $region55: #{tpu_custom_call.1} parent=39 // pred_region
          %324 = dma.done [#allocation15], 1536
        $region56: #{tpu_custom_call.1} parent=39 // pred_fallthru
          _
        %p325 = pneg %p62
        %p326 = pneg %p59
        %s327 = sand.u32 %s34, 1
        %s328 = scalar_lea.sflag [#allocation12], %s327
        %s329 = sand.u32 %s75, 1
        %s330 = smul.addr %s329, 64
        %s331 = scalar_lea.vmem [#allocation11], %s330
        %p332 = pneg %p88
        %p333 = pneg %p85
        %s334 = sand.u32 %s34, 1
        %s335 = scalar_lea.sflag [#allocation12], %s334
        %s336 = sand.u32 %s101, 1
        %s337 = smul.addr %s336, 8
        %s338 = scalar_lea.vmem [#allocation13], %s337
        %p339 = pneg %p114
        %p340 = pneg %p111
        %p341 = pneg %p135
        %p342 = pneg %p132
        %p343 = pneg %p156
        %p344 = pneg %p153
        %p345 = pneg %p177
        %p346 = pneg %p174
        %p347 = pneg %p198
        %p348 = pneg %p195
        %v350 = vld [vmem:[#allocation14] sm:$0xff]
        %v351 = vld [vmem:[#allocation14 + $0x8] sm:$0xff]
        %v352 = vld [vmem:[#allocation14 + $0x10] sm:$0xff]
        %v353 = vld [vmem:[#allocation14 + $0x18] sm:$0xff]
        %v354 = vld [vmem:[#allocation14 + $0x20] sm:$0xff]
        %v355 = vld [vmem:[#allocation14 + $0x28] sm:$0xff]
        %v356 = vld [vmem:[#allocation14 + $0x30] sm:$0xff]
        %v357 = vld [vmem:[#allocation14 + $0x38] sm:$0xff]
        %v358 = vld [vmem:[#allocation14 + $0x40] sm:$0xff]
        %v359 = vld [vmem:[#allocation14 + $0x48] sm:$0xff]
        %v360 = vld [vmem:[#allocation14 + $0x50] sm:$0xff]
        %v361 = vld [vmem:[#allocation14 + $0x58] sm:$0xff]
        %p362 = scmp.eq.s32.totalorder %s38, 0
        %p363 = scmp.eq.s32.totalorder %s39, 0
        %p364 = pnand %p362, %p363
        %p365 = pneg %p364
        // Predicated region
        $region57: #{tpu_custom_call.1} parent=39 // pred_check
          _
        $region58: #{tpu_custom_call.1} parent=39 // pred_check_branch
          %367 = sbr.rel (%p364) target = $region60
        $region59: #{tpu_custom_call.1} parent=39 // pred_region
          %v368 = vld [vmem:[#allocation8] sm:$0xff]
          %v369 = vld [vmem:[#allocation8 + $0x8] sm:$0xff]
          %v370 = vperm.slane %v352, 0
          %vm371 = vcmask 130048
          %v373 = vsel %vm371, %v368, 0
          %v376 = vsel %vm371, %v369, 0
          %378 = vmatpush.msra.mxu0 0.0
          %379 = vmatpush.msra.mxu0 0.0
          %380 = vmatpush.msra.mxu0 0.0
          %381 = vmatpush.msra.mxu0 0.0
          %382 = vmatpush.msra.mxu0 0.0
          %383 = vmatpush.msra.mxu0 0.0
          %384 = vmatpush.msra.mxu0 0.0
          %385 = vmatpush.msra.mxu0 0.0
          %386 = vmatpush.msra.mxu0 0.0
          %387 = vmatpush.msra.mxu0 0.0
          %388 = vmatpush.msra.mxu0 0.0
          %389 = vmatpush.msra.mxu0 0.0
          %390 = vmatpush.msra.mxu0 0.0
          %391 = vmatpush.msra.mxu0 0.0
          %392 = vmatpush.msra.mxu0 %v351
          %393 = vmatpush.msra.mxu0 %v350
          %394 = vmatmul.f32.gmra.mxu0 %v373
          %v395 = vpop.f32.mrf.mxu0
          %v396 = vadd.f32 %v370, %v395
          %397 = vmatmul.f32.gmra.mxu0 %v376
          %v398 = vpop.f32.mrf.mxu0
          %v399 = vadd.f32 %v370, %v398
          %400 = vdwg.mxu0
          %vm401 = vcmask 261120
          %402 = vst.msk [vmem:[#allocation2] sm:$0xff] %vm401, %v396
          %403 = vst.msk [vmem:[#allocation2 + $0x8] sm:$0xff] %vm401, %v399
          %v404 = vld [vmem:[%s4] sm:$0x3]
          %v405 = vperm.slane %v352, 5
          %410 = vrot.lane.b32.xlu0 %v353, 32
          %v411 = vpop.permute.xlu0 %410
          %412 = vrot.lane.b32.xlu0 %v354, 32
          %v413 = vpop.permute.xlu0 %412
          %414 = vrot.lane.b32.xlu0 %v355, 32
          %v415 = vpop.permute.xlu0 %414
          %416 = vrot.lane.b32.xlu0 %v356, 32
          %v417 = vpop.permute.xlu0 %416
          %v423 = vsel %vm401, %v404, 0
          %425 = vmatpush.msra.mxu0 0.0
          %426 = vmatpush.msra.mxu0 0.0
          %427 = vmatpush.msra.mxu0 0.0
          %428 = vmatpush.msra.mxu0 0.0
          %429 = vmatpush.msra.mxu0 0.0
          %430 = vmatpush.msra.mxu0 0.0
          %431 = vmatpush.msra.mxu0 0.0
          %432 = vmatpush.msra.mxu0 0.0
          %433 = vmatpush.msra.mxu0 0.0
          %434 = vmatpush.msra.mxu0 0.0
          %435 = vmatpush.msra.mxu0 0.0
          %436 = vmatpush.msra.mxu0 0.0
          %437 = vmatpush.msra.mxu0 %v417
          %438 = vmatpush.msra.mxu0 %v415
          %439 = vmatpush.msra.mxu0 %v413
          %440 = vmatpush.msra.mxu0 %v411
          %441 = vmatmul.f32.gmra.mxu0 %v423
          %v442 = vpop.f32.mrf.mxu0
          %v443 = vadd.f32 %v405, %v442
          %444 = vdwg.mxu0
          %v445 = vtanh.pop %v443
          %vm446 = vcmask 254976
          %447 = vst.msk [vmem:[#allocation17] sm:$0x3] %vm446, %v445
        $region60: #{tpu_custom_call.1} parent=39 // pred_fallthru
          _
        %s448 = scalar_select %p362, 1, 0
        %v449 = vstv %s448
        %vm450 = vcmp.eq.s32.totalorder %v449, 1
        %455 = vrot.lane.b32.xlu0 %v353, 96
        %v456 = vpop.permute.xlu0 %455
        %457 = vrot.lane.b32.xlu0 %v354, 96
        %v458 = vpop.permute.xlu0 %457
        %459 = vrot.lane.b32.xlu0 %v355, 96
        %v460 = vpop.permute.xlu0 %459
        %461 = vrot.lane.b32.xlu0 %v356, 96
        %v462 = vpop.permute.xlu0 %461
        %v467 = vsel %vm450, %v353, %v456
        %v468 = vsel %vm450, %v354, %v458
        %v469 = vsel %vm450, %v355, %v460
        %v470 = vsel %vm450, %v356, %v462
        %v472 = vrot.slane %v352, 1
        %v474 = vsel %vm450, %v352, %v472
        %479 = vrot.lane.b32.xlu0 %v357, 112
        %v480 = vpop.permute.xlu0 %479
        %481 = vrot.lane.b32.xlu0 %v358, 112
        %v482 = vpop.permute.xlu0 %481
        %483 = vrot.lane.b32.xlu0 %v359, 112
        %v484 = vpop.permute.xlu0 %483
        %485 = vrot.lane.b32.xlu0 %v360, 112
        %v486 = vpop.permute.xlu0 %485
        %v491 = vsel %vm450, %v357, %v480
        %v492 = vsel %vm450, %v358, %v482
        %v493 = vsel %vm450, %v359, %v484
        %v494 = vsel %vm450, %v360, %v486
        %496 = vrot.lane.b32.xlu0 %v361, 120
        %v497 = vpop.permute.xlu0 %496
        %v499 = vsel %vm450, %v361, %v497
        // Predicated region
        $region61: #{tpu_custom_call.1} parent=39 // pred_check
          %p500 = pneg %p363
        $region62: #{tpu_custom_call.1} parent=39 // pred_check_branch
          %502 = sbr.rel (%p500) target = $region64
        $region63: #{tpu_custom_call.1} parent=39 // pred_region
          %v503 = vld [vmem:[#allocation2] sm:$0xff]
          %v504 = vld [vmem:[#allocation2 + $0x8] sm:$0xff]
          %v505 = vpack.c.bf16 %v504, %v503
          %v506 = vpack.c.bf16 %v468, %v467
          %v507 = vpack.c.bf16 %v470, %v469
          %vm508 = vcmask 261120
          %v510 = vsel %vm508, %v505, 0
          %512 = vmatpush.bf16.msra.mxu0 0
          %513 = vmatpush.bf16.msra.mxu0 0
          %514 = vmatpush.bf16.msra.mxu0 0
          %515 = vmatpush.bf16.msra.mxu0 0
          %516 = vmatpush.bf16.msra.mxu0 0
          %517 = vmatpush.bf16.msra.mxu0 0
          %518 = vmatpush.bf16.msra.mxu0 %v507
          %519 = vmatpush.bf16.msra.mxu0 %v506
          %520 = vmatmul.bf16.gmra.mxu0 %v510
          %v521 = vpop.f32.mrf.mxu0
          %v522 = vadd.f32 0.0, %v521
          %v523 = vpop.f32.mrf.mxu0
          %v524 = vadd.f32 0.0, %v523
          %525 = vdwg.mxu0
          %v526 = vpack.c.bf16 %v522, %v522
          %v527 = vpack.c.bf16 %v524, %v524
          %vm528 = vcmask 257024
          %529 = vst.msk [vmem:[#allocation4] sm:$0xf] %vm528, %v526
          %530 = vst.msk [vmem:[#allocation4 + $0x4] sm:$0xf] %vm528, %v527
          %535 = vrot.lane.b32.xlu0 %v491, 80
          %v536 = vpop.permute.xlu0 %535
          %537 = vrot.lane.b32.xlu0 %v492, 80
          %v538 = vpop.permute.xlu0 %537
          %539 = vrot.lane.b32.xlu0 %v493, 80
          %v540 = vpop.permute.xlu0 %539
          %541 = vrot.lane.b32.xlu0 %v494, 80
          %v542 = vpop.permute.xlu0 %541
          %547 = vxpose.xlu0.b32.start [1/16] %v536, 128
          %548 = vxpose.xlu0.b32.cont [2/16] %v538, 128
          %549 = vxpose.xlu0.b32.cont [3/16] %v540, 128
          %550 = vxpose.xlu0.b32.cont [4/16] %v542, 128
          %551 = vxpose.xlu0.b32.cont [5/16] 0.0, 128
          %552 = vxpose.xlu0.b32.cont [6/16] 0.0, 128
          %553 = vxpose.xlu0.b32.cont [7/16] 0.0, 128
          %554 = vxpose.xlu0.b32.cont [8/16] 0.0, 128
          %555 = vxpose.xlu0.b32.cont [9/16] 0.0, 128
          %556 = vxpose.xlu0.b32.cont [10/16] 0.0, 128
          %557 = vxpose.xlu0.b32.cont [11/16] 0.0, 128
          %558 = vxpose.xlu0.b32.cont [12/16] 0.0, 128
          %559 = vxpose.xlu0.b32.cont [13/16] 0.0, 128
          %560 = vxpose.xlu0.b32.cont [14/16] 0.0, 128
          %561 = vxpose.xlu0.b32.cont [15/16] 0.0, 128
          %562 = vxpose.xlu0.b32.end [16/16] 0.0, 128
          %v563 = vpop.trf.xlu0
          %v564 = vpop.trf.xlu0
          %v565 = vpop.trf.xlu0
          %v566 = vpop.trf.xlu0
          %v567 = vpop.trf.xlu0
          %v568 = vpop.trf.xlu0
          %v569 = vpop.trf.xlu0
          %v570 = vpop.trf.xlu0
          %v571 = vpop.trf.xlu0
          %v572 = vpop.trf.xlu0
          %v573 = vpop.trf.xlu0
          %v574 = vpop.trf.xlu0
          %v575 = vpop.trf.xlu0
          %v576 = vpop.trf.xlu0
          %v577 = vpop.trf.xlu0
          %v578 = vpop.trf.xlu0
          %v580 = vsel %vm508, %v563, 0
          %v583 = vsel %vm508, %v503, 0
          %v586 = vsel %vm508, %v504, 0
          %588 = vmatpush.xpose.msra.mxu0 0.0
          %589 = vmatpush.xpose.msra.mxu0 0.0
          %590 = vmatpush.xpose.msra.mxu0 0.0
          %591 = vmatpush.xpose.msra.mxu0 0.0
          %592 = vmatpush.xpose.msra.mxu0 0.0
          %593 = vmatpush.xpose.msra.mxu0 0.0
          %594 = vmatpush.xpose.msra.mxu0 0.0
          %595 = vmatpush.xpose.msra.mxu0 0.0
          %596 = vmatpush.xpose.msra.mxu0 0.0
          %597 = vmatpush.xpose.msra.mxu0 0.0
          %598 = vmatpush.xpose.msra.mxu0 0.0
          %599 = vmatpush.xpose.msra.mxu0 0.0
          %600 = vmatpush.xpose.msra.mxu0 0.0
          %601 = vmatpush.xpose.msra.mxu0 0.0
          %602 = vmatpush.xpose.msra.mxu0 %v586
          %603 = vmatpush.xpose.msra.mxu0 %v583
          %604 = vmatmul.f32.gmra.mxu0 %v580
          %v605 = vpop.f32.mrf.mxu0
          %v606 = vadd.f32 0.0, %v605
          %607 = vdwg.mxu0
          %vm608 = vcmask 125952
          %609 = vst.msk [vmem:[#allocation5] sm:$0xf] %vm608, %v606
        $region64: #{tpu_custom_call.1} parent=39 // pred_fallthru
          _
        %s610 = smul.u32 %s39, 8
        %s611 = scalar_lea.vmem [#allocation2], %s610
        %v612 = vld [vmem:[%s611] sm:$0xff]
        %v613 = vld [vmem:[#allocation5] sm:$0xf]
        %615 = vset.pattern.permute.xlu0 0
        %616 = vperm.xlu0 %615, %v499
        %v617 = vpop.permute.xlu0 %616
        %623 = vrot.lane.b32.xlu0 %v491, 72
        %v624 = vpop.permute.xlu0 %623
        %625 = vrot.lane.b32.xlu0 %v492, 72
        %v626 = vpop.permute.xlu0 %625
        %627 = vrot.lane.b32.xlu0 %v493, 72
        %v628 = vpop.permute.xlu0 %627
        %629 = vrot.lane.b32.xlu0 %v494, 72
        %v630 = vpop.permute.xlu0 %629
        %635 = vxpose.xlu0.b32.start [1/16] %v624, 128
        %636 = vxpose.xlu0.b32.cont [2/16] %v626, 128
        %637 = vxpose.xlu0.b32.cont [3/16] %v628, 128
        %638 = vxpose.xlu0.b32.cont [4/16] %v630, 128
        %639 = vxpose.xlu0.b32.cont [5/16] 0.0, 128
        %640 = vxpose.xlu0.b32.cont [6/16] 0.0, 128
        %641 = vxpose.xlu0.b32.cont [7/16] 0.0, 128
        %642 = vxpose.xlu0.b32.cont [8/16] 0.0, 128
        %643 = vxpose.xlu0.b32.cont [9/16] 0.0, 128
        %644 = vxpose.xlu0.b32.cont [10/16] 0.0, 128
        %645 = vxpose.xlu0.b32.cont [11/16] 0.0, 128
        %646 = vxpose.xlu0.b32.cont [12/16] 0.0, 128
        %647 = vxpose.xlu0.b32.cont [13/16] 0.0, 128
        %648 = vxpose.xlu0.b32.cont [14/16] 0.0, 128
        %649 = vxpose.xlu0.b32.cont [15/16] 0.0, 128
        %650 = vxpose.xlu0.b32.end [16/16] 0.0, 128
        %v651 = vpop.trf.xlu0
        %v652 = vpop.trf.xlu0
        %v653 = vpop.trf.xlu0
        %v654 = vpop.trf.xlu0
        %v655 = vpop.trf.xlu0
        %v656 = vpop.trf.xlu0
        %v657 = vpop.trf.xlu0
        %v658 = vpop.trf.xlu0
        %v659 = vpop.trf.xlu0
        %v660 = vpop.trf.xlu0
        %v661 = vpop.trf.xlu0
        %v662 = vpop.trf.xlu0
        %v663 = vpop.trf.xlu0
        %v664 = vpop.trf.xlu0
        %v665 = vpop.trf.xlu0
        %v666 = vpop.trf.xlu0
        %vm667 = vcmask 261120
        %v669 = vsel %vm667, %v651, 0
        %v672 = vsel %vm667, %v612, 0
        %674 = vmatpush.xpose.msra.mxu0 0.0
        %675 = vmatpush.xpose.msra.mxu0 0.0
        %676 = vmatpush.xpose.msra.mxu0 0.0
        %677 = vmatpush.xpose.msra.mxu0 0.0
        %678 = vmatpush.xpose.msra.mxu0 0.0
        %679 = vmatpush.xpose.msra.mxu0 0.0
        %680 = vmatpush.xpose.msra.mxu0 0.0
        %681 = vmatpush.xpose.msra.mxu0 0.0
        %682 = vmatpush.xpose.msra.mxu0 0.0
        %683 = vmatpush.xpose.msra.mxu0 0.0
        %684 = vmatpush.xpose.msra.mxu0 0.0
        %685 = vmatpush.xpose.msra.mxu0 0.0
        %686 = vmatpush.xpose.msra.mxu0 0.0
        %687 = vmatpush.xpose.msra.mxu0 0.0
        %688 = vmatpush.xpose.msra.mxu0 0.0
        %689 = vmatpush.xpose.msra.mxu0 %v672
        %690 = vmatmul.f32.gmra.mxu0 %v669
        %v691 = vpop.f32.mrf.mxu0
        %v692 = vadd.f32 %v617, %v691
        %693 = vdwg.mxu0
        %v694 = vld [vmem:[%s304] sm:$0xff]
        %v695 = vld [vmem:[%s304 + $0x8] sm:$0xff]
        %v696 = vld [vmem:[%s304 + $0x10] sm:$0xff]
        %v697 = vld [vmem:[%s304 + $0x18] sm:$0xff]
        %v698 = vld [vmem:[%s304 + $0x20] sm:$0xff]
        %v699 = vld [vmem:[%s304 + $0x28] sm:$0xff]
        %v700 = vld [vmem:[%s304 + $0x30] sm:$0xff]
        %v701 = vld [vmem:[%s304 + $0x38] sm:$0xff]
        %s702 = smul.u32 %s38, 32
        %s703 = sld [smem:[#allocation7 + %s702]]
        %v704 = vstv %s703
        %v705 = vmul.f32 %v704, %v694
        %s706 = sadd.s32 %s702, 1
        %s707 = sld [smem:[#allocation7 + %s706]]
        %v708 = vstv %s707
        %v709 = vmul.f32 %v708, %v695
        %v710 = vadd.f32 %v705, %v709
        %s711 = sadd.s32 %s702, 2
        %s712 = sld [smem:[#allocation7 + %s711]]
        %v713 = vstv %s712
        %v714 = vmul.f32 %v713, %v696
        %v715 = vadd.f32 %v710, %v714
        %s716 = sadd.s32 %s702, 3
        %s717 = sld [smem:[#allocation7 + %s716]]
        %v718 = vstv %s717
        %v719 = vmul.f32 %v718, %v697
        %v720 = vadd.f32 %v715, %v719
        %s721 = sadd.s32 %s702, 4
        %s722 = sld [smem:[#allocation7 + %s721]]
        %v723 = vstv %s722
        %v724 = vmul.f32 %v723, %v698
        %v725 = vadd.f32 %v720, %v724
        %s726 = sadd.s32 %s702, 5
        %s727 = sld [smem:[#allocation7 + %s726]]
        %v728 = vstv %s727
        %v729 = vmul.f32 %v728, %v699
        %v730 = vadd.f32 %v725, %v729
        %s731 = sadd.s32 %s702, 6
        %s732 = sld [smem:[#allocation7 + %s731]]
        %v733 = vstv %s732
        %v734 = vmul.f32 %v733, %v700
        %v735 = vadd.f32 %v730, %v734
        %s736 = sadd.s32 %s702, 7
        %s737 = sld [smem:[#allocation7 + %s736]]
        %v738 = vstv %s737
        %v739 = vmul.f32 %v738, %v701
        %v740 = vadd.f32 %v735, %v739
        %s741 = sadd.s32 %s702, 8
        %s742 = sld [smem:[#allocation7 + %s741]]
        %v743 = vstv %s742
        %v744 = vmul.f32 %v743, %v694
        %s745 = sadd.s32 %s702, 9
        %s746 = sld [smem:[#allocation7 + %s745]]
        %v747 = vstv %s746
        %v748 = vmul.f32 %v747, %v695
        %v749 = vadd.f32 %v744, %v748
        %s750 = sadd.s32 %s702, 10
        %s751 = sld [smem:[#allocation7 + %s750]]
        %v752 = vstv %s751
        %v753 = vmul.f32 %v752, %v696
        %v754 = vadd.f32 %v749, %v753
        %s755 = sadd.s32 %s702, 11
        %s756 = sld [smem:[#allocation7 + %s755]]
        %v757 = vstv %s756
        %v758 = vmul.f32 %v757, %v697
        %v759 = vadd.f32 %v754, %v758
        %s760 = sadd.s32 %s702, 12
        %s761 = sld [smem:[#allocation7 + %s760]]
        %v762 = vstv %s761
        %v763 = vmul.f32 %v762, %v698
        %v764 = vadd.f32 %v759, %v763
        %s765 = sadd.s32 %s702, 13
        %s766 = sld [smem:[#allocation7 + %s765]]
        %v767 = vstv %s766
        %v768 = vmul.f32 %v767, %v699
        %v769 = vadd.f32 %v764, %v768
        %s770 = sadd.s32 %s702, 14
        %s771 = sld [smem:[#allocation7 + %s770]]
        %v772 = vstv %s771
        %v773 = vmul.f32 %v772, %v700
        %v774 = vadd.f32 %v769, %v773
        %s775 = sadd.s32 %s702, 15
        %s776 = sld [smem:[#allocation7 + %s775]]
        %v777 = vstv %s776
        %v778 = vmul.f32 %v777, %v701
        %v779 = vadd.f32 %v774, %v778
        %s780 = sadd.s32 %s702, 16
        %s781 = sld [smem:[#allocation7 + %s780]]
        %v782 = vstv %s781
        %v783 = vmul.f32 %v782, %v694
        %s784 = sadd.s32 %s702, 17
        %s785 = sld [smem:[#allocation7 + %s784]]
        %v786 = vstv %s785
        %v787 = vmul.f32 %v786, %v695
        %v788 = vadd.f32 %v783, %v787
        %s789 = sadd.s32 %s702, 18
        %s790 = sld [smem:[#allocation7 + %s789]]
        %v791 = vstv %s790
        %v792 = vmul.f32 %v791, %v696
        %v793 = vadd.f32 %v788, %v792
        %s794 = sadd.s32 %s702, 19
        %s795 = sld [smem:[#allocation7 + %s794]]
        %v796 = vstv %s795
        %v797 = vmul.f32 %v796, %v697
        %v798 = vadd.f32 %v793, %v797
        %s799 = sadd.s32 %s702, 20
        %s800 = sld [smem:[#allocation7 + %s799]]
        %v801 = vstv %s800
        %v802 = vmul.f32 %v801, %v698
        %v803 = vadd.f32 %v798, %v802
        %s804 = sadd.s32 %s702, 21
        %s805 = sld [smem:[#allocation7 + %s804]]
        %v806 = vstv %s805
        %v807 = vmul.f32 %v806, %v699
        %v808 = vadd.f32 %v803, %v807
        %s809 = sadd.s32 %s702, 22
        %s810 = sld [smem:[#allocation7 + %s809]]
        %v811 = vstv %s810
        %v812 = vmul.f32 %v811, %v700
        %v813 = vadd.f32 %v808, %v812
        %s814 = sadd.s32 %s702, 23
        %s815 = sld [smem:[#allocation7 + %s814]]
        %v816 = vstv %s815
        %v817 = vmul.f32 %v816, %v701
        %v818 = vadd.f32 %v813, %v817
        %s819 = sadd.s32 %s702, 24
        %s820 = sld [smem:[#allocation7 + %s819]]
        %v821 = vstv %s820
        %v822 = vmul.f32 %v821, %v694
        %s823 = sadd.s32 %s702, 25
        %s824 = sld [smem:[#allocation7 + %s823]]
        %v825 = vstv %s824
        %v826 = vmul.f32 %v825, %v695
        %v827 = vadd.f32 %v822, %v826
        %s828 = sadd.s32 %s702, 26
        %s829 = sld [smem:[#allocation7 + %s828]]
        %v830 = vstv %s829
        %v831 = vmul.f32 %v830, %v696
        %v832 = vadd.f32 %v827, %v831
        %s833 = sadd.s32 %s702, 27
        %s834 = sld [smem:[#allocation7 + %s833]]
        %v835 = vstv %s834
        %v836 = vmul.f32 %v835, %v697
        %v837 = vadd.f32 %v832, %v836
        %s838 = sadd.s32 %s702, 28
        %s839 = sld [smem:[#allocation7 + %s838]]
        %v840 = vstv %s839
        %v841 = vmul.f32 %v840, %v698
        %v842 = vadd.f32 %v837, %v841
        %s843 = sadd.s32 %s702, 29
        %s844 = sld [smem:[#allocation7 + %s843]]
        %v845 = vstv %s844
        %v846 = vmul.f32 %v845, %v699
        %v847 = vadd.f32 %v842, %v846
        %s848 = sadd.s32 %s702, 30
        %s849 = sld [smem:[#allocation7 + %s848]]
        %v850 = vstv %s849
        %v851 = vmul.f32 %v850, %v700
        %v852 = vadd.f32 %v847, %v851
        %s853 = sadd.s32 %s702, 31
        %s854 = sld [smem:[#allocation7 + %s853]]
        %v855 = vstv %s854
        %v856 = vmul.f32 %v855, %v701
        %v857 = vadd.f32 %v852, %v856
        %v858 = vperm.slane %v692, 0
        %v859 = vlaneseq
        %v860 = vshrl.u32 %v859, 7
        %862 = vset.pattern.permute.xlu0 %v860
        %863 = vperm.xlu0 %862, %v858
        %v864 = vpop.permute.xlu0 %863
        %v865 = vperm.slane %v692, 1
        %v866 = vlaneseq
        %v867 = vshrl.u32 %v866, 7
        %869 = vset.pattern.permute.xlu0 %v867
        %870 = vperm.xlu0 %869, %v865
        %v871 = vpop.permute.xlu0 %870
        %v872 = vperm.slane %v692, 2
        %v873 = vlaneseq
        %v874 = vshrl.u32 %v873, 7
        %876 = vset.pattern.permute.xlu0 %v874
        %877 = vperm.xlu0 %876, %v872
        %v878 = vpop.permute.xlu0 %877
        %v879 = vperm.slane %v692, 3
        %v880 = vlaneseq
        %v881 = vshrl.u32 %v880, 7
        %883 = vset.pattern.permute.xlu0 %v881
        %884 = vperm.xlu0 %883, %v879
        %v885 = vpop.permute.xlu0 %884
        %v887 = vrot.slane %v613, 1
        %v888 = vrot.slane %v613, 2
        %v889 = vrot.slane %v613, 3
        %v890 = vperm.slane %v613, 0
        %v891 = vperm.slane %v887, 0
        %v892 = vperm.slane %v888, 0
        %v893 = vperm.slane %v889, 0
        %v898 = vadd.f32 %v864, %v890
        %v899 = vadd.f32 %v871, %v891
        %v900 = vadd.f32 %v878, %v892
        %v901 = vadd.f32 %v885, %v893
        %v902 = vadd.f32 %v898, %v740
        %v903 = vadd.f32 %v899, %v779
        %v904 = vadd.f32 %v900, %v818
        %v905 = vadd.f32 %v901, %v857
        %vm906 = vcmp.gt.f32.partialorder %v902, 0.0
        %vm907 = vcmp.gt.f32.partialorder %v903, 0.0
        %vm908 = vcmp.gt.f32.partialorder %v904, 0.0
        %vm909 = vcmp.gt.f32.partialorder %v905, 0.0
        %v910 = vmul.f32 %v902, 0.2
        %v911 = vmul.f32 %v903, 0.2
        %v912 = vmul.f32 %v904, 0.2
        %v913 = vmul.f32 %v905, 0.2
        %v914 = vsel %vm906, %v902, %v910
        %v915 = vsel %vm907, %v903, %v911
        %v916 = vsel %vm908, %v904, %v912
        %v917 = vsel %vm909, %v905, %v913
        %v918 = vld [vmem:[%s314] sm:$0xff]
        %v919 = vadd.f32 %v914, %v918
        %v920 = vadd.f32 %v915, %v918
        %v921 = vadd.f32 %v916, %v918
        %v922 = vadd.f32 %v917, %v918
        %vm923 = vcmask 130048
        %v924 = vsel %vm923, %v919, -inf
        %925 = vmax.xlane.f32.xlu0 %v924
        %v926 = vpop.xlane.xlu0 %925
        %v927 = vsel %vm923, %v920, -inf
        %928 = vmax.xlane.f32.xlu0 %v927
        %v929 = vpop.xlane.xlu0 %928
        %v930 = vsel %vm923, %v921, -inf
        %931 = vmax.xlane.f32.xlu0 %v930
        %v932 = vpop.xlane.xlu0 %931
        %v933 = vsel %vm923, %v922, -inf
        %934 = vmax.xlane.f32.xlu0 %v933
        %v935 = vpop.xlane.xlu0 %934
        %v936 = vsub.f32 %v919, %v926
        %v937 = vsub.f32 %v920, %v929
        %v938 = vsub.f32 %v921, %v932
        %v939 = vsub.f32 %v922, %v935
        %v940 = vmul.f32 %v936, 1.442695
        %v941 = vpow.pop %v940
        %v942 = vmul.f32 %v937, 1.442695
        %v943 = vpow.pop %v942
        %v944 = vmul.f32 %v938, 1.442695
        %v945 = vpow.pop %v944
        %v946 = vmul.f32 %v939, 1.442695
        %v947 = vpow.pop %v946
        %v948 = vsel %vm923, %v941, 0.0
        %949 = vadd.xlane.f32.xlu0 %v948
        %v950 = vpop.xlane.xlu0 %949
        %v951 = vsel %vm923, %v943, 0.0
        %952 = vadd.xlane.f32.xlu0 %v951
        %v953 = vpop.xlane.xlu0 %952
        %v954 = vsel %vm923, %v945, 0.0
        %955 = vadd.xlane.f32.xlu0 %v954
        %v956 = vpop.xlane.xlu0 %955
        %v957 = vsel %vm923, %v947, 0.0
        %958 = vadd.xlane.f32.xlu0 %v957
        %v959 = vpop.xlane.xlu0 %958
        %v960 = vrcp.pop %v950
        %v961 = vrcp.pop %v953
        %v962 = vrcp.pop %v956
        %v963 = vrcp.pop %v959
        %v964 = vmul.f32 %v941, %v960
        %v965 = vmul.f32 %v943, %v961
        %v966 = vmul.f32 %v945, %v962
        %v967 = vmul.f32 %v947, %v963
        %v968 = vpack.c.bf16 %v964, %v964
        %v969 = vpack.c.bf16 %v965, %v965
        %v970 = vpack.c.bf16 %v966, %v966
        %v971 = vpack.c.bf16 %v967, %v967
        %v972 = vld [vmem:[#allocation4] sm:$0xf]
        %v973 = vld [vmem:[#allocation4 + $0x4] sm:$0xf]
        %v976 = vunpack.c.l.b16 %v972
        %v977 = vunpack.c.l.b16 %v973
        %v978 = vpack.c.b16 %v977, %v976
        %v981 = vsel %vm923, %v968, 0
        %983 = vmatpush.bf16.msra.mxu0 0
        %984 = vmatpush.bf16.msra.mxu0 0
        %985 = vmatpush.bf16.msra.mxu0 0
        %986 = vmatpush.bf16.msra.mxu0 0
        %987 = vmatpush.bf16.msra.mxu0 0
        %988 = vmatpush.bf16.msra.mxu0 0
        %989 = vmatpush.bf16.msra.mxu0 0
        %990 = vmatpush.bf16.msra.mxu0 %v978
        %991 = vmatmul.bf16.gmra.mxu0 %v981
        %v992 = vpop.f32.mrf.mxu0
        %v993 = vadd.f32 0.0, %v992
        %v994 = vpop.f32.mrf.mxu0
        %995 = vdwg.mxu0
        %996 = vrot.lane.b32.xlu0 %v978, 120
        %v997 = vpop.permute.xlu0 %996
        %v1000 = vsel %vm923, %v969, 0
        %1002 = vmatpush.bf16.msra.mxu0 0
        %1003 = vmatpush.bf16.msra.mxu0 0
        %1004 = vmatpush.bf16.msra.mxu0 0
        %1005 = vmatpush.bf16.msra.mxu0 0
        %1006 = vmatpush.bf16.msra.mxu0 0
        %1007 = vmatpush.bf16.msra.mxu0 0
        %1008 = vmatpush.bf16.msra.mxu0 0
        %1009 = vmatpush.bf16.msra.mxu0 %v997
        %1010 = vmatmul.bf16.gmra.mxu0 %v1000
        %v1011 = vpop.f32.mrf.mxu0
        %v1012 = vadd.f32 0.0, %v1011
        %v1013 = vpop.f32.mrf.mxu0
        %1014 = vdwg.mxu0
        %1015 = vrot.lane.b32.xlu0 %v978, 112
        %v1016 = vpop.permute.xlu0 %1015
        %v1019 = vsel %vm923, %v970, 0
        %1021 = vmatpush.bf16.msra.mxu0 0
        %1022 = vmatpush.bf16.msra.mxu0 0
        %1023 = vmatpush.bf16.msra.mxu0 0
        %1024 = vmatpush.bf16.msra.mxu0 0
        %1025 = vmatpush.bf16.msra.mxu0 0
        %1026 = vmatpush.bf16.msra.mxu0 0
        %1027 = vmatpush.bf16.msra.mxu0 0
        %1028 = vmatpush.bf16.msra.mxu0 %v1016
        %1029 = vmatmul.bf16.gmra.mxu0 %v1019
        %v1030 = vpop.f32.mrf.mxu0
        %v1031 = vadd.f32 0.0, %v1030
        %v1032 = vpop.f32.mrf.mxu0
        %1033 = vdwg.mxu0
        %1034 = vrot.lane.b32.xlu0 %v978, 104
        %v1035 = vpop.permute.xlu0 %1034
        %v1038 = vsel %vm923, %v971, 0
        %1040 = vmatpush.bf16.msra.mxu0 0
        %1041 = vmatpush.bf16.msra.mxu0 0
        %1042 = vmatpush.bf16.msra.mxu0 0
        %1043 = vmatpush.bf16.msra.mxu0 0
        %1044 = vmatpush.bf16.msra.mxu0 0
        %1045 = vmatpush.bf16.msra.mxu0 0
        %1046 = vmatpush.bf16.msra.mxu0 0
        %1047 = vmatpush.bf16.msra.mxu0 %v1035
        %1048 = vmatmul.bf16.gmra.mxu0 %v1038
        %v1049 = vpop.f32.mrf.mxu0
        %v1050 = vadd.f32 0.0, %v1049
        %v1051 = vpop.f32.mrf.mxu0
        %1052 = vdwg.mxu0
        %1054 = vrot.lane.b32.xlu0 %v1012, 8
        %v1055 = vpop.permute.xlu0 %1054
        %1058 = vrot.lane.b32.xlu0 %v1031, 16
        %v1059 = vpop.permute.xlu0 %1058
        %1062 = vrot.lane.b32.xlu0 %v1050, 24
        %v1063 = vpop.permute.xlu0 %1062
        %vm1065 = vcmask 64512
        %v1066 = vsel %vm1065, %v993, %v1055
        %v1067 = vsel %vm923, %v1066, %v1059
        %vm1068 = vcmask 195584
        %v1069 = vsel %vm1068, %v1067, %v1063
        %v1070 = vperm.slane %v474, 1
        %v1071 = vadd.f32 %v1069, %v1070
        %vm1072 = vcmp.gt.f32.partialorder %v1071, 0.0
        %v1073 = vmin.f32 %v1071, 0.0
        %v1074 = vmul.f32 %v1073, 1.442695
        %v1075 = vpow.pop %v1074
        %v1076 = vsub.f32 %v1075, 1.0
        %v1077 = vsel %vm1072, %v1071, %v1076
        %s1078 = scalar_lea.vmem [#allocation3], %s610
        %1079 = vst.msk [vmem:[%s1078] sm:$0xff] %vm667, %v1077
        %p1080 = scmp.eq.s32.totalorder %s39, 1
        // Predicated region
        $region65: #{tpu_custom_call.1} parent=39 // pred_check
          %p1081 = pneg %p1080
        $region66: #{tpu_custom_call.1} parent=39 // pred_check_branch
          %1083 = sbr.rel (%p1081) target = $region68
        $region67: #{tpu_custom_call.1} parent=39 // pred_region
          %v1084 = vld [vmem:[#allocation3] sm:$0xff]
          %v1085 = vld [vmem:[#allocation3 + $0x8] sm:$0xff]
          %1086 = vst.msk [vmem:[#allocation2] sm:$0xff] %vm667, %v1084
          %1087 = vst.msk [vmem:[#allocation2 + $0x8] sm:$0xff] %vm667, %v1085
        $region68: #{tpu_custom_call.1} parent=39 // pred_fallthru
          _
        %p1088 = scmp.eq.s32.totalorder %s38, 1
        %p1089 = pnand %p1088, %p1080
        %p1090 = pneg %p1089
        // Predicated region
        $region69: #{tpu_custom_call.1} parent=39 // pred_check
          _
        $region70: #{tpu_custom_call.1} parent=39 // pred_check_branch
          %1092 = sbr.rel (%p1089) target = $region72
        $region71: #{tpu_custom_call.1} parent=39 // pred_region
          %v1093 = vld [vmem:[#allocation3] sm:$0xff]
          %v1094 = vld [vmem:[#allocation3 + $0x8] sm:$0xff]
          %v1095 = vsel %vm667, %v1093, 0.0
          %v1096 = vsel %vm667, %v1094, 0.0
          %v1097 = vadd.f32 %v1095, %v1096
          %v1098 = vrot.slane %v1097, 4
          %v1099 = vadd.f32 %v1097, %v1098
          %v1100 = vrot.slane %v1099, 2
          %v1101 = vadd.f32 %v1099, %v1100
          %v1102 = vrot.slane %v1101, 1
          %v1103 = vadd.f32 %v1101, %v1102
          %v1104 = vrcp.pop 16.0
          %v1105 = vmul.f32 16.0, %v1104
          %v1106 = vsub.f32 1.0, %v1105
          %v1107 = vmul.f32 %v1104, %v1106
          %v1108 = vadd.f32 %v1104, %v1107
          %vm1109 = vweird.f32 %v1104
          %v1110 = vsel %vm1109, %v1104, %v1108
          %v1111 = vmul.f32 %v1103, %v1110
          %1112 = vrot.lane.b32.xlu0 %v353, 64
          %v1113 = vpop.permute.xlu0 %1112
          %1114 = vrot.lane.b32.xlu0 %v354, 64
          %v1115 = vpop.permute.xlu0 %1114
          %1116 = vrot.lane.b32.xlu0 %v355, 64
          %v1117 = vpop.permute.xlu0 %1116
          %1118 = vrot.lane.b32.xlu0 %v356, 64
          %v1119 = vpop.permute.xlu0 %1118
          %v1124 = vrot.slane %v352, 3
          %v1127 = vsel %vm667, %v1111, 0
          %1129 = vmatpush.msra.mxu0 0.0
          %1130 = vmatpush.msra.mxu0 0.0
          %1131 = vmatpush.msra.mxu0 0.0
          %1132 = vmatpush.msra.mxu0 0.0
          %1133 = vmatpush.msra.mxu0 0.0
          %1134 = vmatpush.msra.mxu0 0.0
          %1135 = vmatpush.msra.mxu0 0.0
          %1136 = vmatpush.msra.mxu0 0.0
          %1137 = vmatpush.msra.mxu0 0.0
          %1138 = vmatpush.msra.mxu0 0.0
          %1139 = vmatpush.msra.mxu0 0.0
          %1140 = vmatpush.msra.mxu0 0.0
          %1141 = vmatpush.msra.mxu0 %v1119
          %1142 = vmatpush.msra.mxu0 %v1117
          %1143 = vmatpush.msra.mxu0 %v1115
          %1144 = vmatpush.msra.mxu0 %v1113
          %1145 = vmatmul.f32.gmra.mxu0 %v1127
          %v1146 = vpop.f32.mrf.mxu0
          %v1147 = vadd.f32 %v1124, %v1146
          %1148 = vdwg.mxu0
          %v1149 = vmax.f32 %v1147, 0.0
          %v1150 = vrot.slane %v352, 4
          %v1153 = vsel %vm667, %v1149, 0
          %1155 = vmatpush.msra.mxu0 0.0
          %1156 = vmatpush.msra.mxu0 0.0
          %1157 = vmatpush.msra.mxu0 0.0
          %1158 = vmatpush.msra.mxu0 0.0
          %1159 = vmatpush.msra.mxu0 0.0
          %1160 = vmatpush.msra.mxu0 0.0
          %1161 = vmatpush.msra.mxu0 0.0
          %1162 = vmatpush.msra.mxu0 0.0
          %1163 = vmatpush.msra.mxu0 0.0
          %1164 = vmatpush.msra.mxu0 0.0
          %1165 = vmatpush.msra.mxu0 0.0
          %1166 = vmatpush.msra.mxu0 0.0
          %1167 = vmatpush.msra.mxu0 %v360
          %1168 = vmatpush.msra.mxu0 %v359
          %1169 = vmatpush.msra.mxu0 %v358
          %1170 = vmatpush.msra.mxu0 %v357
          %1171 = vmatmul.f32.gmra.mxu0 %v1153
          %v1172 = vpop.f32.mrf.mxu0
          %v1173 = vadd.f32 %v1150, %v1172
          %1174 = vdwg.mxu0
          %vm1175 = vcmask 385024
          %1176 = vst.msk [vmem:[#allocation16] sm:$0x1] %vm1175, %v1173
        $region72: #{tpu_custom_call.1} parent=39 // pred_fallthru
          _
        // Predicated region
        $region73: #{tpu_custom_call.1} parent=39 // pred_check
          %p1177 = pneg %p174
        $region74: #{tpu_custom_call.1} parent=39 // pred_check_branch
          %1179 = sbr.rel (%p1177) target = $region76
        $region75: #{tpu_custom_call.1} parent=39 // pred_region
          %1181 = vsyncadd [#allocation10], 0
          %s1183 = sshll.u32 [#allocation16], 4
          %s1184 = int_to_ptr.vmem [resolvable:$true] %s1183
          %s1185 = sshll.u32 %s6, 4
          %s1186 = int_to_ptr.hbm [resolvable:$true] %s1185
          %1188 = dma.vmem_to_hbm [thread:$0]  %s1184, 16, %s1186, [#allocation10]
        $region76: #{tpu_custom_call.1} parent=39 // pred_fallthru
          _
        // Predicated region
        $region77: #{tpu_custom_call.1} parent=39 // pred_check
          %p1189 = pneg %p195
        $region78: #{tpu_custom_call.1} parent=39 // pred_check_branch
          %1191 = sbr.rel (%p1189) target = $region80
        $region79: #{tpu_custom_call.1} parent=39 // pred_region
          %1193 = vsyncadd [#allocation18], 0
          %s1195 = sshll.u32 [#allocation17], 4
          %s1196 = int_to_ptr.vmem [resolvable:$true] %s1195
          %s1197 = sshll.u32 %s7, 4
          %s1198 = int_to_ptr.hbm [resolvable:$true] %s1197
          %1200 = dma.vmem_to_hbm [thread:$0]  %s1196, 32, %s1198, [#allocation18]
        $region80: #{tpu_custom_call.1} parent=39 // pred_fallthru
          _
        // Predicated region
        $region81: #{tpu_custom_call.1} parent=39 // pred_check
          %p1201 = pneg %p174
        $region82: #{tpu_custom_call.1} parent=39 // pred_check_branch
          %1203 = sbr.rel (%p1201) target = $region84
        $region83: #{tpu_custom_call.1} parent=39 // pred_region
          %1205 = dma.done [#allocation10], 16
        $region84: #{tpu_custom_call.1} parent=39 // pred_fallthru
          _
        // Predicated region
        $region85: #{tpu_custom_call.1} parent=39 // pred_check
          %p1206 = pneg %p195
        $region86: #{tpu_custom_call.1} parent=39 // pred_check_branch
          %1208 = sbr.rel (%p1206) target = $region88
        $region87: #{tpu_custom_call.1} parent=39 // pred_region
          %1210 = dma.done [#allocation18], 32
        $region88: #{tpu_custom_call.1} parent=39 // pred_fallthru
          _
      $region40: #{tpu_custom_call.1} parent=5 // pred_fallthru
        _
      %p1211 = scmp.le.s32.totalorder 2, %s29
      // Predicated region
      $region89: #{tpu_custom_call.1} parent=5 // pred_check
        %p1212 = pneg %p1211
      $region90: #{tpu_custom_call.1} parent=5 // pred_check_branch
        %1214 = sbr.rel (%p1212) target = $region92
      $region91: #{tpu_custom_call.1} parent=5 // pred_region
        %s1215 = ssub.s32 %s29, 2
      $region92: #{tpu_custom_call.1} parent=5 // pred_fallthru
        _
    $region6: #{tpu_custom_call.1} parent=1 // loop_footer
      %s33 = sadd.s32 1, %s29
    $region7: #{tpu_custom_call.1} parent=1 // loop_footer_branch
      %28 = sbr.rel target = $region3
    $region8: #{tpu_custom_call.1} parent=1 // loop_exit
      _
    %1216 = vsyncpa [#allocation9], 1
    %s1217 = scalar_lea.sflag [#allocation9], 1
    %1218 = vsyncpa %s1217, 1
    %1219 = vsyncpa [#allocation12], 1
    %s1220 = scalar_lea.sflag [#allocation12], 1
    %1221 = vsyncpa %s1220, 1
    %1222 = vsyncpa [#allocation15], 1
    %1223 = vsyncpa [#allocation10], 1
    %s1224 = scalar_lea.sflag [#allocation10], 1
    %1225 = vsyncpa %s1224, 1
    %1226 = vsyncpa [#allocation18], 1

</llo_original>
